<compile_context>
chip_gen: v5e
topology: v5e:2x2
jax: 0.10.0
libtpu: 0.0.40
codegen_flags: <defaults>
</compile_context>

<pallas_src>
import functools

import jax
import jax.numpy as jnp
from jax.experimental import pallas as pl
from jax.experimental.pallas import tpu as pltpu


# ---------------- model hyper-params (consistent with the PyTorch module) -------------
APPEND_INFORMATION = [False] * 9          # -> features_nums = 2 (just x,y coords)
FEATURES = int(sum(APPEND_INFORMATION)) + 2
if APPEND_INFORMATION[8]:
    FEATURES -= 1                         # matches the module's special-case

EMBED_DIM = 32
HEAD_NUM = 4
QKV_DIM = 8                               # head_num * qkv_dim == embedding_dim
FF_HIDDEN = 64

BATCH = 32                                # folded into the row grid (16 instances/tile)
N_NODES = 8


# ------------------------------- Pallas kernel ---------------------------------------
def tsp_encoder_kernel(
    x_ref,              # (R, F)           f32   R = tile_b * n_nodes rows of this tile
    mask_ref,           # (R, R)           f32   0 within an instance, -1e9 across
    we_ref, be_ref,     # (F, D) bf16, (1, D) f32
    wxqkv_ref,          # (F, 3*H*dk) bf16  = We @ [Wq | Wk | Wv]   (embedding folded in)
    bqkv_ref,           # (1, 3*H*dk) f32   = be @ [Wq | Wk | Wv]
    wc_ref, bc_ref,     # (H*dk, D) bf16, (1, D) f32
    w1_ref, b1_ref,     # (D, FF) bf16, (1, FF) f32
    w2_ref, b2_ref,     # (FF, D) bf16, (1, D) f32
    o_ref,              # (R, D)           f32
    *, head_num, qkv_dim,
):
    f32 = jnp.float32
    bf16 = jnp.bfloat16
    hd = head_num * qkv_dim

    x = x_ref[...].astype(bf16)                                                   # (R, F)

    # Two independent matmuls straight from x (emb->QKV dependency broken by the
    # host-side weight fold): they can issue to the MXU back-to-back.
    emb = jnp.dot(x, we_ref[...], preferred_element_type=f32) + be_ref[...]       # (R, D)
    qkv = jnp.dot(x, wxqkv_ref[...], preferred_element_type=f32) + bqkv_ref[...]  # (R, 3hd)
    qkv = qkv.astype(bf16)

    # Head-major stacks (H, R, dk).  The only per-head work left is a few static lane
    # slices; all attention math below is fused across heads and instances.
    def head_stack(base):
        return jnp.stack(
            [qkv[:, base + h * qkv_dim: base + (h + 1) * qkv_dim]
             for h in range(head_num)], axis=0)

    q = head_stack(0)            # (H, R, dk)
    k = head_stack(hd)
    v = head_stack(2 * hd)

    # Block-diagonal masked attention over the whole row slab: ONE scores einsum,
    # ONE softmax, ONE weights@V einsum for all heads / all instances in the tile.
    inv_sqrt_dk = 1.0 / float(qkv_dim) ** 0.5
    s = jnp.einsum("hnd,hmd->hnm", q, k, preferred_element_type=f32)              # (H, R, R)
    s = s * inv_sqrt_dk + mask_ref[...]                            # -1e9 on cross-instance
    s = s - jnp.max(s, axis=-1, keepdims=True)                     # stable softmax
    p = jnp.exp(s)
    p = p * pl.reciprocal(jnp.sum(p, axis=-1, keepdims=True), approx=True)

    o = jnp.einsum("hnm,hmd->hnd", p.astype(bf16), v,
                   preferred_element_type=f32)                                    # (H, R, dk)

    # out_concat in PyTorch's head-major column order, then ONE combine matmul (K=H*dk).
    out_concat = jnp.concatenate([o[h] for h in range(head_num)], axis=-1).astype(bf16)
    mh = jnp.dot(out_concat, wc_ref[...], preferred_element_type=f32) + bc_ref[...]

    out1 = emb + mh                                                               # residual 1

    # feed-forward: W2(relu(W1(out1)))
    hidden = jnp.maximum(
        jnp.dot(out1.astype(bf16), w1_ref[...], preferred_element_type=f32) + b1_ref[...],
        0.0)
    ff = jnp.dot(hidden.astype(bf16), w2_ref[...], preferred_element_type=f32) + b2_ref[...]

    o_ref[...] = (out1 + ff).astype(o_ref.dtype)                                  # one store


# ------------------------------- wrapper ----------------------------------------------
def _pick_tile_b(batch, n_nodes, target_rows=128):
    """Largest divisor of `batch` whose row tile stays <= target_rows."""
    best = 1
    for d in range(1, batch + 1):
        if batch % d == 0 and d * n_nodes <= target_rows:
            best = d
    return best


def tsp_encoder(data, params, tile_b=None):
    B, N, F = data.shape
    D = EMBED_DIM
    H, dk = HEAD_NUM, QKV_DIM
    bf16 = jnp.bfloat16

    if tile_b is None:
        tile_b = _pick_tile_b(B, N)
    assert B % tile_b == 0, "tile_b must divide the batch"
    rows = tile_b * N
    assert rows % 8 == 0 or B // tile_b == 1, "row tile should be sublane aligned"
    grid = (B // tile_b,)

    # ---- host-side prep (constant-folded / fused under jit) -------------------------
    x2 = data.reshape(B * N, F)
    wqkv = jnp.concatenate([params["wq"], params["wk"], params["wv"]], axis=1)    # (D, 3hd)
    wxqkv = (params["we"] @ wqkv).astype(bf16)     # (F, 3hd): x @ wxqkv == emb @ wqkv
    bqkv = params["be"] @ wqkv                     # (1, 3hd) f32
    we = params["we"].astype(bf16)
    wc = params["wc"].astype(bf16)
    w1 = params["w1"].astype(bf16)
    w2 = params["w2"].astype(bf16)

    # Block-diagonal additive mask: rows attend only within their own TSP instance.
    inst = jnp.arange(rows) // N
    mask = jnp.where(inst[:, None] == inst[None, :], 0.0, -1e9).astype(jnp.float32)

    kernel = functools.partial(tsp_encoder_kernel, head_num=H, qkv_dim=dk)

    def whole(arr):
        # whole-array (grid-invariant) block
        return pl.BlockSpec(arr.shape, lambda i: (0, 0))

    out2d = pl.pallas_call(
        kernel,
        out_shape=jax.ShapeDtypeStruct((B * N, D), jnp.float32),
        grid=grid,
        in_specs=[
            pl.BlockSpec((rows, F), lambda i: (i, 0)),        # x rows of this tile
            whole(mask),
            whole(we), whole(params["be"]),
            whole(wxqkv), whole(bqkv),
            whole(wc), whole(params["bc"]),
            whole(w1), whole(params["b1"]),
            whole(w2), whole(params["b2"]),
        ],
        out_specs=pl.BlockSpec((rows, D), lambda i: (i, 0)),
        compiler_params=pltpu.CompilerParams(
            dimension_semantics=("parallel",)),                # v7x: split rows across TCs
    )(
        x2, mask,
        we, params["be"],
        wxqkv, bqkv,
        wc, params["bc"],
        w1, params["b1"],
        w2, params["b2"],
    )
    return out2d.reshape(B, N, D)


# --------------------------- pure-JAX reference (for sanity) --------------------------
# Faithful PyTorch op order; matmul operands cast like the kernel's MXU casts so the
# comparison is tight (matmul_dtype=jnp.float32 gives the exact f32 module semantics).
def tsp_encoder_ref(data, p, matmul_dtype=jnp.bfloat16):
    def mm(a, b):
        return jnp.dot(a.astype(matmul_dtype), b.astype(matmul_dtype),
                       preferred_element_type=jnp.float32)

    B, N, _ = data.shape
    x2 = data.reshape(B * N, -1)
    emb = mm(x2, p["we"]) + p["be"]
    q, k, v = mm(emb, p["wq"]), mm(emb, p["wk"]), mm(emb, p["wv"])
    rh = lambda t: (t.reshape(B, N, HEAD_NUM, QKV_DIM)
                     .transpose(0, 2, 1, 3).astype(matmul_dtype))
    qh, kh, vh = rh(q), rh(k), rh(v)
    s = jnp.einsum("bhnd,bhmd->bhnm", qh, kh,
                   preferred_element_type=jnp.float32) / jnp.sqrt(jnp.float32(QKV_DIM))
    w = jax.nn.softmax(s, axis=-1)
    o = jnp.einsum("bhnm,bhmd->bhnd", w.astype(matmul_dtype), vh,
                   preferred_element_type=jnp.float32)
    oc = o.transpose(0, 2, 1, 3).reshape(B * N, HEAD_NUM * QKV_DIM)
    mh = mm(oc, p["wc"]) + p["bc"]
    out1 = emb + mh
    ff = mm(jnp.maximum(mm(out1, p["w1"]) + p["b1"], 0.0), p["w2"]) + p["b2"]
    return (out1 + ff).reshape(B, N, EMBED_DIM)


# ------------------------------- param init -------------------------------------------
def init_params(key):
    def linear(key, fan_in, fan_out, bias):
        kw, kb = jax.random.split(key)
        bound = 1.0 / jnp.sqrt(jnp.float32(fan_in))
        w = jax.random.uniform(kw, (fan_in, fan_out), jnp.float32, -bound, bound)
        b = (jax.random.uniform(kb, (1, fan_out), jnp.float32, -bound, bound)
             if bias else None)
        return w, b

    ks = jax.random.split(key, 7)
    we, be = linear(ks[0], FEATURES, EMBED_DIM, True)
    wq, _ = linear(ks[1], EMBED_DIM, HEAD_NUM * QKV_DIM, False)
    wk, _ = linear(ks[2], EMBED_DIM, HEAD_NUM * QKV_DIM, False)
    wv, _ = linear(ks[3], EMBED_DIM, HEAD_NUM * QKV_DIM, False)
    wc, bc = linear(ks[4], HEAD_NUM * QKV_DIM, EMBED_DIM, True)
    w1, b1 = linear(ks[5], EMBED_DIM, FF_HIDDEN, True)
    w2, b2 = linear(ks[6], FF_HIDDEN, EMBED_DIM, True)
    return dict(we=we, be=be, wq=wq, wk=wk, wv=wv, wc=wc, bc=bc,
                w1=w1, b1=b1, w2=w2, b2=b2)


# ------------------------------------ main ---------------------------------------------
if __name__ == "__main__":
    key = jax.random.PRNGKey(0)
    k_data, k_params = jax.random.split(key)

    data = jax.random.normal(k_data, (BATCH, N_NODES, FEATURES), jnp.float32)
    params = init_params(k_params)

    out = jax.jit(tsp_encoder)(data, params)     # grid=(2,), 128-row tiles at these shapes
    out = jax.block_until_ready(out)

    ref = tsp_encoder_ref(data, params)          # bf16-matmul reference mirroring MXU casts
    assert out.shape == (BATCH, N_NODES, EMBED_DIM)
    # Tolerance covers bf16 rounding (incl. the host-side We@Wqkv fold), accumulation
    # order differences and the approx EUP reciprocal.
    assert jnp.allclose(out, ref, atol=3e-2, rtol=3e-2), "mismatch vs JAX reference"

    print("KERNEL_OK")
</pallas_src>

<mosaic_0001>
module attributes {stable_mosaic.version = 11 : i64} {
  func.func @tsp_encoder_kernel(%arg0: i32, %arg1: memref<128x2xf32, #tpu.memory_space<vmem>>, %arg2: memref<128x128xf32, #tpu.memory_space<vmem>>, %arg3: memref<2x32xbf16, #tpu.memory_space<vmem>>, %arg4: memref<1x32xf32, #tpu.memory_space<vmem>>, %arg5: memref<2x96xbf16, #tpu.memory_space<vmem>>, %arg6: memref<1x96xf32, #tpu.memory_space<vmem>>, %arg7: memref<32x32xbf16, #tpu.memory_space<vmem>>, %arg8: memref<1x32xf32, #tpu.memory_space<vmem>>, %arg9: memref<32x64xbf16, #tpu.memory_space<vmem>>, %arg10: memref<1x64xf32, #tpu.memory_space<vmem>>, %arg11: memref<64x32xbf16, #tpu.memory_space<vmem>>, %arg12: memref<1x32xf32, #tpu.memory_space<vmem>>, %arg13: memref<128x32xf32, #tpu.memory_space<vmem>>) attributes {dimension_semantics = [#tpu.dimension_semantics<parallel>], iteration_bounds = array<i64: 2>, scalar_prefetch = 0 : i64, scratch_operands = 0 : i64, tpu.core_type = #tpu.core_type<tc>, window_params = [{transform_indices = @transform_0, window_bounds = array<i64: 128, 2>}, {pipeline_mode = #tpu.pipeline_mode<synchronous>, transform_indices = @transform_1, window_bounds = array<i64: 128, 128>}, {pipeline_mode = #tpu.pipeline_mode<synchronous>, transform_indices = @transform_2, window_bounds = array<i64: 2, 32>}, {pipeline_mode = #tpu.pipeline_mode<synchronous>, transform_indices = @transform_3, window_bounds = array<i64: 1, 32>}, {pipeline_mode = #tpu.pipeline_mode<synchronous>, transform_indices = @transform_4, window_bounds = array<i64: 2, 96>}, {pipeline_mode = #tpu.pipeline_mode<synchronous>, transform_indices = @transform_5, window_bounds = array<i64: 1, 96>}, {pipeline_mode = #tpu.pipeline_mode<synchronous>, transform_indices = @transform_6, window_bounds = array<i64: 32, 32>}, {pipeline_mode = #tpu.pipeline_mode<synchronous>, transform_indices = @transform_7, window_bounds = array<i64: 1, 32>}, {pipeline_mode = #tpu.pipeline_mode<synchronous>, transform_indices = @transform_8, window_bounds = array<i64: 32, 64>}, {pipeline_mode = #tpu.pipeline_mode<synchronous>, transform_indices = @transform_9, window_bounds = array<i64: 1, 64>}, {pipeline_mode = #tpu.pipeline_mode<synchronous>, transform_indices = @transform_10, window_bounds = array<i64: 64, 32>}, {pipeline_mode = #tpu.pipeline_mode<synchronous>, transform_indices = @transform_11, window_bounds = array<i64: 1, 32>}, {transform_indices = @transform_12, window_bounds = array<i64: 128, 32>}]} {
    %c0 = arith.constant 0 : index
    %c0_0 = arith.constant 0 : index
    %0 = vector.load %arg1[%c0, %c0_0] : memref<128x2xf32, #tpu.memory_space<vmem>>, vector<128x2xf32>
    %1 = arith.truncf %0 : vector<128x2xf32> to vector<128x2xbf16>
    %c0_1 = arith.constant 0 : index
    %c0_2 = arith.constant 0 : index
    %2 = vector.load %arg3[%c0_1, %c0_2] : memref<2x32xbf16, #tpu.memory_space<vmem>>, vector<2x32xbf16>
    %cst = arith.constant dense<0.000000e+00> : vector<128x32xf32>
    %3 = tpu.matmul %1, %2, %cst {dimension_numbers = #tpu.dot_dimension_numbers<[1], [0], [0], [1], [0, 0, 1, 1], [], []>} : vector<128x2xbf16>, vector<2x32xbf16>, vector<128x32xf32> -> vector<128x32xf32>
    %c0_3 = arith.constant 0 : index
    %c0_4 = arith.constant 0 : index
    %4 = vector.load %arg4[%c0_3, %c0_4] : memref<1x32xf32, #tpu.memory_space<vmem>>, vector<1x32xf32>
    %5 = vector.broadcast %4 : vector<1x32xf32> to vector<128x32xf32>
    %6 = arith.addf %3, %5 : vector<128x32xf32>
    %c0_5 = arith.constant 0 : index
    %c0_6 = arith.constant 0 : index
    %7 = vector.load %arg5[%c0_5, %c0_6] : memref<2x96xbf16, #tpu.memory_space<vmem>>, vector<2x96xbf16>
    %cst_7 = arith.constant dense<0.000000e+00> : vector<128x96xf32>
    %8 = tpu.matmul %1, %7, %cst_7 {dimension_numbers = #tpu.dot_dimension_numbers<[1], [0], [0], [1], [0, 0, 1, 1], [], []>} : vector<128x2xbf16>, vector<2x96xbf16>, vector<128x96xf32> -> vector<128x96xf32>
    %c0_8 = arith.constant 0 : index
    %c0_9 = arith.constant 0 : index
    %9 = vector.load %arg6[%c0_8, %c0_9] : memref<1x96xf32, #tpu.memory_space<vmem>>, vector<1x96xf32>
    %10 = vector.broadcast %9 : vector<1x96xf32> to vector<128x96xf32>
    %11 = arith.addf %8, %10 : vector<128x96xf32>
    %12 = arith.truncf %11 : vector<128x96xf32> to vector<128x96xbf16>
    %13 = vector.extract_strided_slice %12 {offsets = [0, 0], sizes = [128, 8], strides = [1, 1]} : vector<128x96xbf16> to vector<128x8xbf16>
    %14 = vector.extract_strided_slice %12 {offsets = [0, 8], sizes = [128, 8], strides = [1, 1]} : vector<128x96xbf16> to vector<128x8xbf16>
    %15 = vector.extract_strided_slice %12 {offsets = [0, 16], sizes = [128, 8], strides = [1, 1]} : vector<128x96xbf16> to vector<128x8xbf16>
    %16 = vector.extract_strided_slice %12 {offsets = [0, 24], sizes = [128, 8], strides = [1, 1]} : vector<128x96xbf16> to vector<128x8xbf16>
    %17 = vector.shape_cast %13 : vector<128x8xbf16> to vector<1x128x8xbf16>
    %18 = vector.shape_cast %14 : vector<128x8xbf16> to vector<1x128x8xbf16>
    %19 = vector.shape_cast %15 : vector<128x8xbf16> to vector<1x128x8xbf16>
    %20 = vector.shape_cast %16 : vector<128x8xbf16> to vector<1x128x8xbf16>
    %21 = tpu.concatenate %17, %18, %19, %20 in 0 : vector<1x128x8xbf16>, vector<1x128x8xbf16>, vector<1x128x8xbf16>, vector<1x128x8xbf16> -> vector<4x128x8xbf16>
    %22 = vector.extract_strided_slice %12 {offsets = [0, 32], sizes = [128, 8], strides = [1, 1]} : vector<128x96xbf16> to vector<128x8xbf16>
    %23 = vector.extract_strided_slice %12 {offsets = [0, 40], sizes = [128, 8], strides = [1, 1]} : vector<128x96xbf16> to vector<128x8xbf16>
    %24 = vector.extract_strided_slice %12 {offsets = [0, 48], sizes = [128, 8], strides = [1, 1]} : vector<128x96xbf16> to vector<128x8xbf16>
    %25 = vector.extract_strided_slice %12 {offsets = [0, 56], sizes = [128, 8], strides = [1, 1]} : vector<128x96xbf16> to vector<128x8xbf16>
    %26 = vector.shape_cast %22 : vector<128x8xbf16> to vector<1x128x8xbf16>
    %27 = vector.shape_cast %23 : vector<128x8xbf16> to vector<1x128x8xbf16>
    %28 = vector.shape_cast %24 : vector<128x8xbf16> to vector<1x128x8xbf16>
    %29 = vector.shape_cast %25 : vector<128x8xbf16> to vector<1x128x8xbf16>
    %30 = tpu.concatenate %26, %27, %28, %29 in 0 : vector<1x128x8xbf16>, vector<1x128x8xbf16>, vector<1x128x8xbf16>, vector<1x128x8xbf16> -> vector<4x128x8xbf16>
    %31 = vector.extract_strided_slice %12 {offsets = [0, 64], sizes = [128, 8], strides = [1, 1]} : vector<128x96xbf16> to vector<128x8xbf16>
    %32 = vector.extract_strided_slice %12 {offsets = [0, 72], sizes = [128, 8], strides = [1, 1]} : vector<128x96xbf16> to vector<128x8xbf16>
    %33 = vector.extract_strided_slice %12 {offsets = [0, 80], sizes = [128, 8], strides = [1, 1]} : vector<128x96xbf16> to vector<128x8xbf16>
    %34 = vector.extract_strided_slice %12 {offsets = [0, 88], sizes = [128, 8], strides = [1, 1]} : vector<128x96xbf16> to vector<128x8xbf16>
    %35 = vector.shape_cast %31 : vector<128x8xbf16> to vector<1x128x8xbf16>
    %36 = vector.shape_cast %32 : vector<128x8xbf16> to vector<1x128x8xbf16>
    %37 = vector.shape_cast %33 : vector<128x8xbf16> to vector<1x128x8xbf16>
    %38 = vector.shape_cast %34 : vector<128x8xbf16> to vector<1x128x8xbf16>
    %39 = tpu.concatenate %35, %36, %37, %38 in 0 : vector<1x128x8xbf16>, vector<1x128x8xbf16>, vector<1x128x8xbf16>, vector<1x128x8xbf16> -> vector<4x128x8xbf16>
    "tpu.trace_start"() <{level = 10 : i32, message = "hnd,hmd->hnm"}> : () -> ()
    %cst_10 = arith.constant dense<0.000000e+00> : vector<4x128x128xf32>
    %40 = tpu.matmul %21, %30, %cst_10 {dimension_numbers = #tpu.dot_dimension_numbers<[2], [2], [1], [1], [0, 0, 0, 1, 1, 1], [0], [0]>} : vector<4x128x8xbf16>, vector<4x128x8xbf16>, vector<4x128x128xf32> -> vector<4x128x128xf32>
    "tpu.trace_stop"() : () -> ()
    %cst_11 = arith.constant 0.353553385 : f32
    %41 = vector.broadcast %cst_11 : f32 to vector<4x128x128xf32>
    %42 = arith.mulf %40, %41 : vector<4x128x128xf32>
    %c0_12 = arith.constant 0 : index
    %c0_13 = arith.constant 0 : index
    %43 = vector.load %arg2[%c0_12, %c0_13] : memref<128x128xf32, #tpu.memory_space<vmem>>, vector<128x128xf32>
    %44 = vector.shape_cast %43 : vector<128x128xf32> to vector<1x128x128xf32>
    %45 = vector.broadcast %44 : vector<1x128x128xf32> to vector<4x128x128xf32>
    %46 = arith.addf %42, %45 : vector<4x128x128xf32>
    %cst_14 = arith.constant dense<0xFF800000> : vector<4x128xf32>
    %47 = vector.multi_reduction <maximumf>, %46, %cst_14 [2] : vector<4x128x128xf32> to vector<4x128xf32>
    %48 = vector.shape_cast %47 : vector<4x128xf32> to vector<4x128x1xf32>
    %49 = vector.broadcast %48 : vector<4x128x1xf32> to vector<4x128x128xf32>
    %50 = arith.subf %46, %49 : vector<4x128x128xf32>
    %51 = math.exp %50 : vector<4x128x128xf32>
    %cst_15 = arith.constant dense<0.000000e+00> : vector<4x128xf32>
    %52 = vector.multi_reduction <add>, %51, %cst_15 [2] : vector<4x128x128xf32> to vector<4x128xf32>
    %53 = vector.shape_cast %52 : vector<4x128xf32> to vector<4x128x1xf32>
    %54 = tpu.reciprocal %53 {approx = true} : vector<4x128x1xf32> -> vector<4x128x1xf32>
    %55 = vector.broadcast %54 : vector<4x128x1xf32> to vector<4x128x128xf32>
    %56 = arith.mulf %51, %55 : vector<4x128x128xf32>
    %57 = arith.truncf %56 : vector<4x128x128xf32> to vector<4x128x128xbf16>
    "tpu.trace_start"() <{level = 10 : i32, message = "hnm,hmd->hnd"}> : () -> ()
    %cst_16 = arith.constant dense<0.000000e+00> : vector<4x128x8xf32>
    %58 = tpu.matmul %57, %39, %cst_16 {dimension_numbers = #tpu.dot_dimension_numbers<[2], [1], [1], [2], [0, 0, 0, 1, 1, 2], [0], [0]>} : vector<4x128x128xbf16>, vector<4x128x8xbf16>, vector<4x128x8xf32> -> vector<4x128x8xf32>
    "tpu.trace_stop"() : () -> ()
    %59 = vector.extract_strided_slice %58 {offsets = [0, 0, 0], sizes = [1, 128, 8], strides = [1, 1, 1]} : vector<4x128x8xf32> to vector<1x128x8xf32>
    %60 = vector.shape_cast %59 : vector<1x128x8xf32> to vector<128x8xf32>
    %61 = vector.extract_strided_slice %58 {offsets = [1, 0, 0], sizes = [1, 128, 8], strides = [1, 1, 1]} : vector<4x128x8xf32> to vector<1x128x8xf32>
    %62 = vector.shape_cast %61 : vector<1x128x8xf32> to vector<128x8xf32>
    %63 = vector.extract_strided_slice %58 {offsets = [2, 0, 0], sizes = [1, 128, 8], strides = [1, 1, 1]} : vector<4x128x8xf32> to vector<1x128x8xf32>
    %64 = vector.shape_cast %63 : vector<1x128x8xf32> to vector<128x8xf32>
    %65 = vector.extract_strided_slice %58 {offsets = [3, 0, 0], sizes = [1, 128, 8], strides = [1, 1, 1]} : vector<4x128x8xf32> to vector<1x128x8xf32>
    %66 = vector.shape_cast %65 : vector<1x128x8xf32> to vector<128x8xf32>
    %67 = tpu.concatenate %60, %62, %64, %66 in 1 : vector<128x8xf32>, vector<128x8xf32>, vector<128x8xf32>, vector<128x8xf32> -> vector<128x32xf32>
    %68 = arith.truncf %67 : vector<128x32xf32> to vector<128x32xbf16>
    %c0_17 = arith.constant 0 : index
    %c0_18 = arith.constant 0 : index
    %69 = vector.load %arg7[%c0_17, %c0_18] : memref<32x32xbf16, #tpu.memory_space<vmem>>, vector<32x32xbf16>
    %cst_19 = arith.constant dense<0.000000e+00> : vector<128x32xf32>
    %70 = tpu.matmul %68, %69, %cst_19 {dimension_numbers = #tpu.dot_dimension_numbers<[1], [0], [0], [1], [0, 0, 1, 1], [], []>} : vector<128x32xbf16>, vector<32x32xbf16>, vector<128x32xf32> -> vector<128x32xf32>
    %c0_20 = arith.constant 0 : index
    %c0_21 = arith.constant 0 : index
    %71 = vector.load %arg8[%c0_20, %c0_21] : memref<1x32xf32, #tpu.memory_space<vmem>>, vector<1x32xf32>
    %72 = vector.broadcast %71 : vector<1x32xf32> to vector<128x32xf32>
    %73 = arith.addf %70, %72 : vector<128x32xf32>
    %74 = arith.addf %6, %73 : vector<128x32xf32>
    %75 = arith.truncf %74 : vector<128x32xf32> to vector<128x32xbf16>
    %c0_22 = arith.constant 0 : index
    %c0_23 = arith.constant 0 : index
    %76 = vector.load %arg9[%c0_22, %c0_23] : memref<32x64xbf16, #tpu.memory_space<vmem>>, vector<32x64xbf16>
    %cst_24 = arith.constant dense<0.000000e+00> : vector<128x64xf32>
    %77 = tpu.matmul %75, %76, %cst_24 {dimension_numbers = #tpu.dot_dimension_numbers<[1], [0], [0], [1], [0, 0, 1, 1], [], []>} : vector<128x32xbf16>, vector<32x64xbf16>, vector<128x64xf32> -> vector<128x64xf32>
    %c0_25 = arith.constant 0 : index
    %c0_26 = arith.constant 0 : index
    %78 = vector.load %arg10[%c0_25, %c0_26] : memref<1x64xf32, #tpu.memory_space<vmem>>, vector<1x64xf32>
    %79 = vector.broadcast %78 : vector<1x64xf32> to vector<128x64xf32>
    %80 = arith.addf %77, %79 : vector<128x64xf32>
    %cst_27 = arith.constant 0.000000e+00 : f32
    %81 = vector.broadcast %cst_27 : f32 to vector<128x64xf32>
    %82 = arith.maximumf %80, %81 : vector<128x64xf32>
    %83 = arith.truncf %82 : vector<128x64xf32> to vector<128x64xbf16>
    %c0_28 = arith.constant 0 : index
    %c0_29 = arith.constant 0 : index
    %84 = vector.load %arg11[%c0_28, %c0_29] : memref<64x32xbf16, #tpu.memory_space<vmem>>, vector<64x32xbf16>
    %cst_30 = arith.constant dense<0.000000e+00> : vector<128x32xf32>
    %85 = tpu.matmul %83, %84, %cst_30 {dimension_numbers = #tpu.dot_dimension_numbers<[1], [0], [0], [1], [0, 0, 1, 1], [], []>} : vector<128x64xbf16>, vector<64x32xbf16>, vector<128x32xf32> -> vector<128x32xf32>
    %c0_31 = arith.constant 0 : index
    %c0_32 = arith.constant 0 : index
    %86 = vector.load %arg12[%c0_31, %c0_32] : memref<1x32xf32, #tpu.memory_space<vmem>>, vector<1x32xf32>
    %87 = vector.broadcast %86 : vector<1x32xf32> to vector<128x32xf32>
    %88 = arith.addf %85, %87 : vector<128x32xf32>
    %89 = arith.addf %74, %88 : vector<128x32xf32>
    %c0_33 = arith.constant 0 : index
    %c0_34 = arith.constant 0 : index
    %90 = vector.load %arg13[%c0_33, %c0_34] : memref<128x32xf32, #tpu.memory_space<vmem>>, vector<128x32xf32>
    tpu.vector_store %arg13[%c0_33, %c0_34], %89 {strides = array<i32>} : memref<128x32xf32, #tpu.memory_space<vmem>>, vector<128x32xf32>,
    return
  }
  func.func @transform_0(%arg0: i32) -> (i32, i32) {
    %c0_i32 = arith.constant 0 : i32
    %c0_i32_0 = arith.constant 0 : i32
    return %arg0, %c0_i32 : i32, i32
  }
  func.func @transform_1(%arg0: i32) -> (i32, i32) {
    %c0_i32 = arith.constant 0 : i32
    %c0_i32_0 = arith.constant 0 : i32
    %c0_i32_1 = arith.constant 0 : i32
    return %c0_i32, %c0_i32_0 : i32, i32
  }
  func.func @transform_2(%arg0: i32) -> (i32, i32) {
    %c0_i32 = arith.constant 0 : i32
    %c0_i32_0 = arith.constant 0 : i32
    %c0_i32_1 = arith.constant 0 : i32
    return %c0_i32, %c0_i32_0 : i32, i32
  }
  func.func @transform_3(%arg0: i32) -> (i32, i32) {
    %c0_i32 = arith.constant 0 : i32
    %c0_i32_0 = arith.constant 0 : i32
    %c0_i32_1 = arith.constant 0 : i32
    return %c0_i32, %c0_i32_0 : i32, i32
  }
  func.func @transform_4(%arg0: i32) -> (i32, i32) {
    %c0_i32 = arith.constant 0 : i32
    %c0_i32_0 = arith.constant 0 : i32
    %c0_i32_1 = arith.constant 0 : i32
    return %c0_i32, %c0_i32_0 : i32, i32
  }
  func.func @transform_5(%arg0: i32) -> (i32, i32) {
    %c0_i32 = arith.constant 0 : i32
    %c0_i32_0 = arith.constant 0 : i32
    %c0_i32_1 = arith.constant 0 : i32
    return %c0_i32, %c0_i32_0 : i32, i32
  }
  func.func @transform_6(%arg0: i32) -> (i32, i32) {
    %c0_i32 = arith.constant 0 : i32
    %c0_i32_0 = arith.constant 0 : i32
    %c0_i32_1 = arith.constant 0 : i32
    return %c0_i32, %c0_i32_0 : i32, i32
  }
  func.func @transform_7(%arg0: i32) -> (i32, i32) {
    %c0_i32 = arith.constant 0 : i32
    %c0_i32_0 = arith.constant 0 : i32
    %c0_i32_1 = arith.constant 0 : i32
    return %c0_i32, %c0_i32_0 : i32, i32
  }
  func.func @transform_8(%arg0: i32) -> (i32, i32) {
    %c0_i32 = arith.constant 0 : i32
    %c0_i32_0 = arith.constant 0 : i32
    %c0_i32_1 = arith.constant 0 : i32
    return %c0_i32, %c0_i32_0 : i32, i32
  }
  func.func @transform_9(%arg0: i32) -> (i32, i32) {
    %c0_i32 = arith.constant 0 : i32
    %c0_i32_0 = arith.constant 0 : i32
    %c0_i32_1 = arith.constant 0 : i32
    return %c0_i32, %c0_i32_0 : i32, i32
  }
  func.func @transform_10(%arg0: i32) -> (i32, i32) {
    %c0_i32 = arith.constant 0 : i32
    %c0_i32_0 = arith.constant 0 : i32
    %c0_i32_1 = arith.constant 0 : i32
    return %c0_i32, %c0_i32_0 : i32, i32
  }
  func.func @transform_11(%arg0: i32) -> (i32, i32) {
    %c0_i32 = arith.constant 0 : i32
    %c0_i32_0 = arith.constant 0 : i32
    %c0_i32_1 = arith.constant 0 : i32
    return %c0_i32, %c0_i32_0 : i32, i32
  }
  func.func @transform_12(%arg0: i32) -> (i32, i32) {
    %c0_i32 = arith.constant 0 : i32
    %c0_i32_0 = arith.constant 0 : i32
    return %arg0, %c0_i32 : i32, i32
  }
}

</mosaic_0001>

<llo_original>
// kernel: tsp_encoder.1
$region0: #{tsp_encoder.1}
  #allocation0 [shape = 'u32[]', space=smem, size = 0x4, offset = 0x4, fixed_abs, tag = 'smem constant byte address 0x4 - core index']
  #allocation1 [shape = 'u32[72,128]{1,0:T(1,128)}', space=vmem, size = 0x9000, scoped, tag = 'internal scratch']
  %s0 = inlined_call_operand.vmem [shape: f32[256,2], index: 0, kind: input, shape index: {}]
  %s1 = inlined_call_operand.vmem [shape: f32[128,128], index: 1, kind: input, shape index: {}]
  %s2 = inlined_call_operand.vmem [shape: bf16[2,32], index: 2, kind: input, shape index: {}]
  %s3 = inlined_call_operand.vmem [shape: f32[1,32], index: 3, kind: input, shape index: {}]
  %s4 = inlined_call_operand.vmem [shape: bf16[2,96], index: 4, kind: input, shape index: {}]
  %s5 = inlined_call_operand.vmem [shape: f32[1,96], index: 5, kind: input, shape index: {}]
  %s6 = inlined_call_operand.vmem [shape: bf16[32,32], index: 6, kind: input, shape index: {}]
  %s7 = inlined_call_operand.vmem [shape: f32[1,32], index: 7, kind: input, shape index: {}]
  %s8 = inlined_call_operand.vmem [shape: bf16[32,64], index: 8, kind: input, shape index: {}]
  %s9 = inlined_call_operand.vmem [shape: f32[1,64], index: 9, kind: input, shape index: {}]
  %s10 = inlined_call_operand.vmem [shape: bf16[64,32], index: 10, kind: input, shape index: {}]
  %s11 = inlined_call_operand.vmem [shape: f32[1,32], index: 11, kind: input, shape index: {}]
  %s12 = inlined_call_operand.hbm [shape: f32[256,32], index: 12, kind: output, shape index: {}]
  %s13 = sld [smem:[#allocation0]]
  $region81: #{tsp_encoder.1} parent=0
    _
  %s15 = ssub.s32 1, %s13
  %s16 = scalar_select 0, %s15, %s13
  $region1: #{tsp_encoder.1} parent=0
    #allocation2 [shape = 'u8[131072]{0}', space=vmem, size = 0x20000, scoped, tag = 'output window, operand 0']
    #allocation3 [shape = 's32[2]{0}', space=sflag, size = 0x8, scoped, tag = 'scoped memory for tsp_encoder.1']
    %17 = vsyncpa [#allocation3], 0
    %s18 = scalar_lea.sflag [#allocation3], 1
    %19 = vsyncpa %s18, 0
    loop: start=0, step=1, limit=4
    $region2: #{tsp_encoder.1} parent=1 // loop_pre_header
      _
    $region3: #{tsp_encoder.1} parent=1 // loop_header
      %s21 = sphi 0, %s25
      %p22 = scmp.ge.s32.totalorder %s21, 4
      %s31 = sphi 0, %s33
      %s34 = sphi 0, %s31
      %s35 = sphi 0, %s34
      %s51 = sphi 0, %s35
      %s55 = sphi 0, %s55
      %s57 = sphi 0, %s55
      %s58 = sphi 0, %s57
      %s72 = sphi 0, %s58
      %s76 = sphi 0, %s76
      %s78 = sphi 0, %s76
      %s79 = sphi 0, %s78
      %s93 = sphi 0, %s79
      %s97 = sphi 0, %s97
      %s99 = sphi 0, %s97
      %s100 = sphi 0, %s99
      %s114 = sphi 0, %s100
      %s118 = sphi 0, %s118
      %s120 = sphi 0, %s118
      %s121 = sphi 0, %s120
      %s135 = sphi 0, %s121
      %s139 = sphi 0, %s139
      %s141 = sphi 0, %s139
      %s142 = sphi 0, %s141
      %s156 = sphi 0, %s142
      %s160 = sphi 0, %s160
      %s162 = sphi 0, %s160
      %s163 = sphi 0, %s162
      %s177 = sphi 0, %s163
      %s181 = sphi 0, %s181
      %s183 = sphi 0, %s181
      %s184 = sphi 0, %s183
      %s198 = sphi 0, %s184
      %s202 = sphi 0, %s202
      %s204 = sphi 0, %s202
      %s205 = sphi 0, %s204
      %s219 = sphi 0, %s205
      %s223 = sphi 0, %s223
      %s225 = sphi 0, %s223
      %s226 = sphi 0, %s225
      %s240 = sphi 0, %s226
      %s244 = sphi 0, %s244
      %s246 = sphi 0, %s244
      %s247 = sphi 0, %s246
      %s261 = sphi 0, %s247
      %s265 = sphi 0, %s265
      %s267 = sphi 0, %s265
      %s268 = sphi 0, %s267
      %s282 = sphi 0, %s268
      %s288 = sphi 0, %s290
      %s291 = sphi 0, %s288
      %s292 = sphi 0, %s291
      %s308 = sphi 0, %s292
    $region4: #{tsp_encoder.1} parent=1 // loop_header_branch
      %24 = sbr.rel (%p22) target = $region8
    $region5: #{tsp_encoder.1} parent=1 // loop_body
      %s26 = ssub.s32 %s21, 1
      %s27 = ssub.s32 %s21, 2
      %s28 = sadd.s32 %s21, 1
      %s29 = ssub.s32 %s21, %s28
      %p30 = scmp.eq.s32.totalorder %s29, 0
      %s32 = sadd.s32 %s31, 1
      %s33 = scalar_select %p30, %s31, %s32
      %p36 = pneg %p30
      %p37 = scmp.eq.s32.totalorder %s21, 1
      %p38 = por %p36, %p37
      %p39 = scmp.ne.s32.totalorder %s31, %s34
      %p40 = scmp.eq.s32.totalorder %s21, 0
      %p41 = por %p39, %p40
      %p42 = scmp.ne.s32.totalorder %s31, %s34
      %p43 = scmp.eq.s32.totalorder %s26, 1
      %p44 = por %p42, %p43
      %p45 = scmp.ne.s32.totalorder %s34, %s35
      %p46 = scmp.eq.s32.totalorder %s26, 0
      %p47 = por %p45, %p46
      %p48 = scmp.ne.s32.totalorder %s34, %s35
      %p49 = scmp.eq.s32.totalorder %s27, 1
      %p50 = por %p48, %p49
      %p52 = scmp.ne.s32.totalorder %s35, %s51
      %p53 = scmp.eq.s32.totalorder %s27, 0
      %p54 = por %p52, %p53
      %s56 = sadd.s32 %s55, 1
      %p59 = scmp.eq.s32.totalorder %s21, 1
      %p60 = scmp.ne.s32.totalorder %s55, %s57
      %p61 = scmp.eq.s32.totalorder %s21, 0
      %p62 = por %p60, %p61
      %p63 = scmp.ne.s32.totalorder %s55, %s57
      %p64 = scmp.eq.s32.totalorder %s26, 1
      %p65 = por %p63, %p64
      %p66 = scmp.ne.s32.totalorder %s57, %s58
      %p67 = scmp.eq.s32.totalorder %s26, 0
      %p68 = por %p66, %p67
      %p69 = scmp.ne.s32.totalorder %s57, %s58
      %p70 = scmp.eq.s32.totalorder %s27, 1
      %p71 = por %p69, %p70
      %p73 = scmp.ne.s32.totalorder %s58, %s72
      %p74 = scmp.eq.s32.totalorder %s27, 0
      %p75 = por %p73, %p74
      %s77 = sadd.s32 %s76, 1
      %p80 = scmp.eq.s32.totalorder %s21, 1
      %p81 = scmp.ne.s32.totalorder %s76, %s78
      %p82 = scmp.eq.s32.totalorder %s21, 0
      %p83 = por %p81, %p82
      %p84 = scmp.ne.s32.totalorder %s76, %s78
      %p85 = scmp.eq.s32.totalorder %s26, 1
      %p86 = por %p84, %p85
      %p87 = scmp.ne.s32.totalorder %s78, %s79
      %p88 = scmp.eq.s32.totalorder %s26, 0
      %p89 = por %p87, %p88
      %p90 = scmp.ne.s32.totalorder %s78, %s79
      %p91 = scmp.eq.s32.totalorder %s27, 1
      %p92 = por %p90, %p91
      %p94 = scmp.ne.s32.totalorder %s79, %s93
      %p95 = scmp.eq.s32.totalorder %s27, 0
      %p96 = por %p94, %p95
      %s98 = sadd.s32 %s97, 1
      %p101 = scmp.eq.s32.totalorder %s21, 1
      %p102 = scmp.ne.s32.totalorder %s97, %s99
      %p103 = scmp.eq.s32.totalorder %s21, 0
      %p104 = por %p102, %p103
      %p105 = scmp.ne.s32.totalorder %s97, %s99
      %p106 = scmp.eq.s32.totalorder %s26, 1
      %p107 = por %p105, %p106
      %p108 = scmp.ne.s32.totalorder %s99, %s100
      %p109 = scmp.eq.s32.totalorder %s26, 0
      %p110 = por %p108, %p109
      %p111 = scmp.ne.s32.totalorder %s99, %s100
      %p112 = scmp.eq.s32.totalorder %s27, 1
      %p113 = por %p111, %p112
      %p115 = scmp.ne.s32.totalorder %s100, %s114
      %p116 = scmp.eq.s32.totalorder %s27, 0
      %p117 = por %p115, %p116
      %s119 = sadd.s32 %s118, 1
      %p122 = scmp.eq.s32.totalorder %s21, 1
      %p123 = scmp.ne.s32.totalorder %s118, %s120
      %p124 = scmp.eq.s32.totalorder %s21, 0
      %p125 = por %p123, %p124
      %p126 = scmp.ne.s32.totalorder %s118, %s120
      %p127 = scmp.eq.s32.totalorder %s26, 1
      %p128 = por %p126, %p127
      %p129 = scmp.ne.s32.totalorder %s120, %s121
      %p130 = scmp.eq.s32.totalorder %s26, 0
      %p131 = por %p129, %p130
      %p132 = scmp.ne.s32.totalorder %s120, %s121
      %p133 = scmp.eq.s32.totalorder %s27, 1
      %p134 = por %p132, %p133
      %p136 = scmp.ne.s32.totalorder %s121, %s135
      %p137 = scmp.eq.s32.totalorder %s27, 0
      %p138 = por %p136, %p137
      %s140 = sadd.s32 %s139, 1
      %p143 = scmp.eq.s32.totalorder %s21, 1
      %p144 = scmp.ne.s32.totalorder %s139, %s141
      %p145 = scmp.eq.s32.totalorder %s21, 0
      %p146 = por %p144, %p145
      %p147 = scmp.ne.s32.totalorder %s139, %s141
      %p148 = scmp.eq.s32.totalorder %s26, 1
      %p149 = por %p147, %p148
      %p150 = scmp.ne.s32.totalorder %s141, %s142
      %p151 = scmp.eq.s32.totalorder %s26, 0
      %p152 = por %p150, %p151
      %p153 = scmp.ne.s32.totalorder %s141, %s142
      %p154 = scmp.eq.s32.totalorder %s27, 1
      %p155 = por %p153, %p154
      %p157 = scmp.ne.s32.totalorder %s142, %s156
      %p158 = scmp.eq.s32.totalorder %s27, 0
      %p159 = por %p157, %p158
      %s161 = sadd.s32 %s160, 1
      %p164 = scmp.eq.s32.totalorder %s21, 1
      %p165 = scmp.ne.s32.totalorder %s160, %s162
      %p166 = scmp.eq.s32.totalorder %s21, 0
      %p167 = por %p165, %p166
      %p168 = scmp.ne.s32.totalorder %s160, %s162
      %p169 = scmp.eq.s32.totalorder %s26, 1
      %p170 = por %p168, %p169
      %p171 = scmp.ne.s32.totalorder %s162, %s163
      %p172 = scmp.eq.s32.totalorder %s26, 0
      %p173 = por %p171, %p172
      %p174 = scmp.ne.s32.totalorder %s162, %s163
      %p175 = scmp.eq.s32.totalorder %s27, 1
      %p176 = por %p174, %p175
      %p178 = scmp.ne.s32.totalorder %s163, %s177
      %p179 = scmp.eq.s32.totalorder %s27, 0
      %p180 = por %p178, %p179
      %s182 = sadd.s32 %s181, 1
      %p185 = scmp.eq.s32.totalorder %s21, 1
      %p186 = scmp.ne.s32.totalorder %s181, %s183
      %p187 = scmp.eq.s32.totalorder %s21, 0
      %p188 = por %p186, %p187
      %p189 = scmp.ne.s32.totalorder %s181, %s183
      %p190 = scmp.eq.s32.totalorder %s26, 1
      %p191 = por %p189, %p190
      %p192 = scmp.ne.s32.totalorder %s183, %s184
      %p193 = scmp.eq.s32.totalorder %s26, 0
      %p194 = por %p192, %p193
      %p195 = scmp.ne.s32.totalorder %s183, %s184
      %p196 = scmp.eq.s32.totalorder %s27, 1
      %p197 = por %p195, %p196
      %p199 = scmp.ne.s32.totalorder %s184, %s198
      %p200 = scmp.eq.s32.totalorder %s27, 0
      %p201 = por %p199, %p200
      %s203 = sadd.s32 %s202, 1
      %p206 = scmp.eq.s32.totalorder %s21, 1
      %p207 = scmp.ne.s32.totalorder %s202, %s204
      %p208 = scmp.eq.s32.totalorder %s21, 0
      %p209 = por %p207, %p208
      %p210 = scmp.ne.s32.totalorder %s202, %s204
      %p211 = scmp.eq.s32.totalorder %s26, 1
      %p212 = por %p210, %p211
      %p213 = scmp.ne.s32.totalorder %s204, %s205
      %p214 = scmp.eq.s32.totalorder %s26, 0
      %p215 = por %p213, %p214
      %p216 = scmp.ne.s32.totalorder %s204, %s205
      %p217 = scmp.eq.s32.totalorder %s27, 1
      %p218 = por %p216, %p217
      %p220 = scmp.ne.s32.totalorder %s205, %s219
      %p221 = scmp.eq.s32.totalorder %s27, 0
      %p222 = por %p220, %p221
      %s224 = sadd.s32 %s223, 1
      %p227 = scmp.eq.s32.totalorder %s21, 1
      %p228 = scmp.ne.s32.totalorder %s223, %s225
      %p229 = scmp.eq.s32.totalorder %s21, 0
      %p230 = por %p228, %p229
      %p231 = scmp.ne.s32.totalorder %s223, %s225
      %p232 = scmp.eq.s32.totalorder %s26, 1
      %p233 = por %p231, %p232
      %p234 = scmp.ne.s32.totalorder %s225, %s226
      %p235 = scmp.eq.s32.totalorder %s26, 0
      %p236 = por %p234, %p235
      %p237 = scmp.ne.s32.totalorder %s225, %s226
      %p238 = scmp.eq.s32.totalorder %s27, 1
      %p239 = por %p237, %p238
      %p241 = scmp.ne.s32.totalorder %s226, %s240
      %p242 = scmp.eq.s32.totalorder %s27, 0
      %p243 = por %p241, %p242
      %s245 = sadd.s32 %s244, 1
      %p248 = scmp.eq.s32.totalorder %s21, 1
      %p249 = scmp.ne.s32.totalorder %s244, %s246
      %p250 = scmp.eq.s32.totalorder %s21, 0
      %p251 = por %p249, %p250
      %p252 = scmp.ne.s32.totalorder %s244, %s246
      %p253 = scmp.eq.s32.totalorder %s26, 1
      %p254 = por %p252, %p253
      %p255 = scmp.ne.s32.totalorder %s246, %s247
      %p256 = scmp.eq.s32.totalorder %s26, 0
      %p257 = por %p255, %p256
      %p258 = scmp.ne.s32.totalorder %s246, %s247
      %p259 = scmp.eq.s32.totalorder %s27, 1
      %p260 = por %p258, %p259
      %p262 = scmp.ne.s32.totalorder %s247, %s261
      %p263 = scmp.eq.s32.totalorder %s27, 0
      %p264 = por %p262, %p263
      %s266 = sadd.s32 %s265, 1
      %p269 = scmp.eq.s32.totalorder %s21, 1
      %p270 = scmp.ne.s32.totalorder %s265, %s267
      %p271 = scmp.eq.s32.totalorder %s21, 0
      %p272 = por %p270, %p271
      %p273 = scmp.ne.s32.totalorder %s265, %s267
      %p274 = scmp.eq.s32.totalorder %s26, 1
      %p275 = por %p273, %p274
      %p276 = scmp.ne.s32.totalorder %s267, %s268
      %p277 = scmp.eq.s32.totalorder %s26, 0
      %p278 = por %p276, %p277
      %p279 = scmp.ne.s32.totalorder %s267, %s268
      %p280 = scmp.eq.s32.totalorder %s27, 1
      %p281 = por %p279, %p280
      %p283 = scmp.ne.s32.totalorder %s268, %s282
      %p284 = scmp.eq.s32.totalorder %s27, 0
      %p285 = por %p283, %p284
      %s286 = ssub.s32 %s21, %s28
      %p287 = scmp.eq.s32.totalorder %s286, 0
      %s289 = sadd.s32 %s288, 1
      %s290 = scalar_select %p287, %s288, %s289
      %p293 = pneg %p287
      %p294 = scmp.eq.s32.totalorder %s21, 1
      %p295 = por %p293, %p294
      %p296 = scmp.ne.s32.totalorder %s288, %s291
      %p297 = scmp.eq.s32.totalorder %s21, 0
      %p298 = por %p296, %p297
      %p299 = scmp.ne.s32.totalorder %s288, %s291
      %p300 = scmp.eq.s32.totalorder %s26, 1
      %p301 = por %p299, %p300
      %p302 = scmp.ne.s32.totalorder %s291, %s292
      %p303 = scmp.eq.s32.totalorder %s26, 0
      %p304 = por %p302, %p303
      %p305 = scmp.ne.s32.totalorder %s291, %s292
      %p306 = scmp.eq.s32.totalorder %s27, 1
      %p307 = por %p305, %p306
      %p309 = scmp.ne.s32.totalorder %s292, %s308
      %p310 = scmp.eq.s32.totalorder %s27, 0
      %p311 = por %p309, %p310
      %p312 = scmp.le.s32.totalorder 1, %s21
      %p313 = scmp.lt.s32.totalorder %s21, 3
      %p314 = pnand %p312, %p313
      %p315 = pneg %p314
      // Predicated region
      $region9: #{tsp_encoder.1} parent=5 // pred_check
        _
      $region10: #{tsp_encoder.1} parent=5 // pred_check_branch
        %317 = sbr.rel (%p314) target = $region12
      $region11: #{tsp_encoder.1} parent=5 // pred_region
        %s318 = ssub.s32 %s21, 1
        // Predicated region
        $region13: #{tsp_encoder.1} parent=11 // pred_check
          %p319 = pneg %p68
        $region14: #{tsp_encoder.1} parent=11 // pred_check_branch
          %321 = sbr.rel (%p319) target = $region16
        $region15: #{tsp_encoder.1} parent=11 // pred_region
          _
        $region16: #{tsp_encoder.1} parent=11 // pred_fallthru
          _
        // Predicated region
        $region17: #{tsp_encoder.1} parent=11 // pred_check
          %p322 = pneg %p89
        $region18: #{tsp_encoder.1} parent=11 // pred_check_branch
          %324 = sbr.rel (%p322) target = $region20
        $region19: #{tsp_encoder.1} parent=11 // pred_region
          _
        $region20: #{tsp_encoder.1} parent=11 // pred_fallthru
          _
        // Predicated region
        $region21: #{tsp_encoder.1} parent=11 // pred_check
          %p325 = pneg %p110
        $region22: #{tsp_encoder.1} parent=11 // pred_check_branch
          %327 = sbr.rel (%p325) target = $region24
        $region23: #{tsp_encoder.1} parent=11 // pred_region
          _
        $region24: #{tsp_encoder.1} parent=11 // pred_fallthru
          _
        // Predicated region
        $region25: #{tsp_encoder.1} parent=11 // pred_check
          %p328 = pneg %p131
        $region26: #{tsp_encoder.1} parent=11 // pred_check_branch
          %330 = sbr.rel (%p328) target = $region28
        $region27: #{tsp_encoder.1} parent=11 // pred_region
          _
        $region28: #{tsp_encoder.1} parent=11 // pred_fallthru
          _
        // Predicated region
        $region29: #{tsp_encoder.1} parent=11 // pred_check
          %p331 = pneg %p152
        $region30: #{tsp_encoder.1} parent=11 // pred_check_branch
          %333 = sbr.rel (%p331) target = $region32
        $region31: #{tsp_encoder.1} parent=11 // pred_region
          _
        $region32: #{tsp_encoder.1} parent=11 // pred_fallthru
          _
        // Predicated region
        $region33: #{tsp_encoder.1} parent=11 // pred_check
          %p334 = pneg %p173
        $region34: #{tsp_encoder.1} parent=11 // pred_check_branch
          %336 = sbr.rel (%p334) target = $region36
        $region35: #{tsp_encoder.1} parent=11 // pred_region
          _
        $region36: #{tsp_encoder.1} parent=11 // pred_fallthru
          _
        // Predicated region
        $region37: #{tsp_encoder.1} parent=11 // pred_check
          %p337 = pneg %p194
        $region38: #{tsp_encoder.1} parent=11 // pred_check_branch
          %339 = sbr.rel (%p337) target = $region40
        $region39: #{tsp_encoder.1} parent=11 // pred_region
          _
        $region40: #{tsp_encoder.1} parent=11 // pred_fallthru
          _
        // Predicated region
        $region41: #{tsp_encoder.1} parent=11 // pred_check
          %p340 = pneg %p215
        $region42: #{tsp_encoder.1} parent=11 // pred_check_branch
          %342 = sbr.rel (%p340) target = $region44
        $region43: #{tsp_encoder.1} parent=11 // pred_region
          _
        $region44: #{tsp_encoder.1} parent=11 // pred_fallthru
          _
        // Predicated region
        $region45: #{tsp_encoder.1} parent=11 // pred_check
          %p343 = pneg %p236
        $region46: #{tsp_encoder.1} parent=11 // pred_check_branch
          %345 = sbr.rel (%p343) target = $region48
        $region47: #{tsp_encoder.1} parent=11 // pred_region
          _
        $region48: #{tsp_encoder.1} parent=11 // pred_fallthru
          _
        // Predicated region
        $region49: #{tsp_encoder.1} parent=11 // pred_check
          %p346 = pneg %p257
        $region50: #{tsp_encoder.1} parent=11 // pred_check_branch
          %348 = sbr.rel (%p346) target = $region52
        $region51: #{tsp_encoder.1} parent=11 // pred_region
          _
        $region52: #{tsp_encoder.1} parent=11 // pred_fallthru
          _
        // Predicated region
        $region53: #{tsp_encoder.1} parent=11 // pred_check
          %p349 = pneg %p278
        $region54: #{tsp_encoder.1} parent=11 // pred_check_branch
          %351 = sbr.rel (%p349) target = $region56
        $region55: #{tsp_encoder.1} parent=11 // pred_region
          _
        $region56: #{tsp_encoder.1} parent=11 // pred_fallthru
          _
      $region12: #{tsp_encoder.1} parent=5 // pred_fallthru
        _
      %p352 = scmp.lt.s32.totalorder %s21, 2
      // Predicated region
      $region57: #{tsp_encoder.1} parent=5 // pred_check
        %p353 = pneg %p352
      $region58: #{tsp_encoder.1} parent=5 // pred_check_branch
        %355 = sbr.rel (%p353) target = $region60
      $region59: #{tsp_encoder.1} parent=5 // pred_region
        // Predicated region
        $region61: #{tsp_encoder.1} parent=59 // pred_check
          %p356 = pneg %p41
        $region62: #{tsp_encoder.1} parent=59 // pred_check_branch
          %358 = sbr.rel (%p356) target = $region64
        $region63: #{tsp_encoder.1} parent=59 // pred_region
          %s359 = smul.u32 16, %s21
          %p360 = scmp.lt.s32.totalorder %s359, 31
          %s361 = scalar_select %p360, %s359, 31
          %s362 = smul.addr %s361, 8
          %s363 = scalar_lea.vmem %s0, %s362
          %s364 = smul.u32 16, %s21
        $region64: #{tsp_encoder.1} parent=59 // pred_fallthru
          _
      $region60: #{tsp_encoder.1} parent=5 // pred_fallthru
        _
      %p365 = scmp.le.s32.totalorder 1, %s21
      %p366 = scmp.lt.s32.totalorder %s21, 3
      %p367 = pnand %p365, %p366
      %p368 = pneg %p367
      // Predicated region
      $region65: #{tsp_encoder.1} parent=5 // pred_check
        _
      $region66: #{tsp_encoder.1} parent=5 // pred_check_branch
        %370 = sbr.rel (%p367) target = $region68
      $region67: #{tsp_encoder.1} parent=5 // pred_region
        %s371 = ssub.s32 %s21, 1
        %s372 = smul.u32 16, %s26
        %p373 = scmp.lt.s32.totalorder %s372, 31
        %s374 = scalar_select %p373, %s372, 31
        %s375 = smul.addr %s374, 8
        %s376 = scalar_lea.vmem %s0, %s375
        %p377 = pneg %p47
        %p378 = pneg %p44
        %p379 = pneg %p68
        %p380 = pneg %p65
        %p381 = pneg %p89
        %p382 = pneg %p86
        %p383 = pneg %p110
        %p384 = pneg %p107
        %p385 = pneg %p131
        %p386 = pneg %p128
        %p387 = pneg %p152
        %p388 = pneg %p149
        %p389 = pneg %p173
        %p390 = pneg %p170
        %p391 = pneg %p194
        %p392 = pneg %p191
        %p393 = pneg %p215
        %p394 = pneg %p212
        %p395 = pneg %p236
        %p396 = pneg %p233
        %p397 = pneg %p257
        %p398 = pneg %p254
        %p399 = pneg %p278
        %p400 = pneg %p275
        %p401 = pneg %p304
        %p402 = pneg %p301
        %s403 = sand.u32 %s291, 1
        %s404 = scalar_lea.sflag [#allocation3], %s403
        %s405 = sand.u32 %s291, 1
        %s406 = smul.addr %s405, 128
        %s407 = scalar_lea.vmem [#allocation2], %s406
        %s408 = smul.u32 16, %s26
        %p409 = scmp.lt.s32.totalorder %s408, 31
        %s410 = scalar_select %p409, %s408, 31
        %s411 = smul.addr %s410, 8
        %s412 = scalar_lea.vmem %s0, %s411
        %s413 = smul.u32 16, %s26
        %s414 = smul.u32 16, %s26
        %v416 = vld [vmem:[%s412] sm:$0xff]
        %v417 = vld [vmem:[%s412 + $0x8] sm:$0xff]
        %v418 = vld [vmem:[%s412 + $0x10] sm:$0xff]
        %v419 = vld [vmem:[%s412 + $0x18] sm:$0xff]
        %v420 = vld [vmem:[%s412 + $0x20] sm:$0xff]
        %v421 = vld [vmem:[%s412 + $0x28] sm:$0xff]
        %v422 = vld [vmem:[%s412 + $0x30] sm:$0xff]
        %v423 = vld [vmem:[%s412 + $0x38] sm:$0xff]
        %v424 = vld [vmem:[%s412 + $0x40] sm:$0xff]
        %v425 = vld [vmem:[%s412 + $0x48] sm:$0xff]
        %v426 = vld [vmem:[%s412 + $0x50] sm:$0xff]
        %v427 = vld [vmem:[%s412 + $0x58] sm:$0xff]
        %v428 = vld [vmem:[%s412 + $0x60] sm:$0xff]
        %v429 = vld [vmem:[%s412 + $0x68] sm:$0xff]
        %v430 = vld [vmem:[%s412 + $0x70] sm:$0xff]
        %v431 = vld [vmem:[%s412 + $0x78] sm:$0xff]
        %v432 = vpack.c.bf16 %v417, %v416
        %v433 = vpack.c.bf16 %v419, %v418
        %v434 = vpack.c.bf16 %v421, %v420
        %v435 = vpack.c.bf16 %v423, %v422
        %v436 = vpack.c.bf16 %v425, %v424
        %v437 = vpack.c.bf16 %v427, %v426
        %v438 = vpack.c.bf16 %v429, %v428
        %v439 = vpack.c.bf16 %v431, %v430
        %v440 = vld [vmem:[%s2] sm:$0x1]
        %v441 = vld [vmem:[%s3] sm:$0x1]
        %v443 = vperm.slane %v441, 0
        %vm445 = vcmask 15360
        %v447 = vsel %vm445, %v432, 0
        %v450 = vsel %vm445, %v433, 0
        %v453 = vsel %vm445, %v434, 0
        %v456 = vsel %vm445, %v435, 0
        %v459 = vsel %vm445, %v436, 0
        %v462 = vsel %vm445, %v437, 0
        %v465 = vsel %vm445, %v438, 0
        %v468 = vsel %vm445, %v439, 0
        %vm470 = vcmask 1040384
        %v472 = vsel %vm470, %v440, 0
        %474 = vmatpush.bf16.msra.mxu0 0
        %475 = vmatpush.bf16.msra.mxu0 0
        %476 = vmatpush.bf16.msra.mxu0 0
        %477 = vmatpush.bf16.msra.mxu0 0
        %478 = vmatpush.bf16.msra.mxu0 0
        %479 = vmatpush.bf16.msra.mxu0 0
        %480 = vmatpush.bf16.msra.mxu0 0
        %481 = vmatpush.bf16.msra.mxu0 %v472
        %482 = vmatmul.bf16.gmra.mxu0 %v447
        %v483 = vpop.f32.mrf.mxu0
        %v484 = vadd.f32 %v443, %v483
        %v485 = vpop.f32.mrf.mxu0
        %v486 = vadd.f32 %v443, %v485
        %487 = vmatmul.bf16.gmra.mxu0 %v450
        %v488 = vpop.f32.mrf.mxu0
        %v489 = vadd.f32 %v443, %v488
        %v490 = vpop.f32.mrf.mxu0
        %v491 = vadd.f32 %v443, %v490
        %492 = vmatmul.bf16.gmra.mxu0 %v453
        %v493 = vpop.f32.mrf.mxu0
        %v494 = vadd.f32 %v443, %v493
        %v495 = vpop.f32.mrf.mxu0
        %v496 = vadd.f32 %v443, %v495
        %497 = vmatmul.bf16.gmra.mxu0 %v456
        %v498 = vpop.f32.mrf.mxu0
        %v499 = vadd.f32 %v443, %v498
        %v500 = vpop.f32.mrf.mxu0
        %v501 = vadd.f32 %v443, %v500
        %502 = vmatmul.bf16.gmra.mxu0 %v459
        %v503 = vpop.f32.mrf.mxu0
        %v504 = vadd.f32 %v443, %v503
        %v505 = vpop.f32.mrf.mxu0
        %v506 = vadd.f32 %v443, %v505
        %507 = vmatmul.bf16.gmra.mxu0 %v462
        %v508 = vpop.f32.mrf.mxu0
        %v509 = vadd.f32 %v443, %v508
        %v510 = vpop.f32.mrf.mxu0
        %v511 = vadd.f32 %v443, %v510
        %512 = vmatmul.bf16.gmra.mxu0 %v465
        %v513 = vpop.f32.mrf.mxu0
        %v514 = vadd.f32 %v443, %v513
        %v515 = vpop.f32.mrf.mxu0
        %v516 = vadd.f32 %v443, %v515
        %517 = vmatmul.bf16.gmra.mxu0 %v468
        %v518 = vpop.f32.mrf.mxu0
        %v519 = vadd.f32 %v443, %v518
        %v520 = vpop.f32.mrf.mxu0
        %v521 = vadd.f32 %v443, %v520
        %522 = vdwg.mxu0
        %v523 = vld [vmem:[%s4] sm:$0x1]
        %v524 = vld [vmem:[%s5] sm:$0x1]
        %v526 = vperm.slane %v524, 0
        %v529 = vsel %vm470, %v523, 0
        %531 = vmatpush.bf16.msra.mxu0 0
        %532 = vmatpush.bf16.msra.mxu0 0
        %533 = vmatpush.bf16.msra.mxu0 0
        %534 = vmatpush.bf16.msra.mxu0 0
        %535 = vmatpush.bf16.msra.mxu0 0
        %536 = vmatpush.bf16.msra.mxu0 0
        %537 = vmatpush.bf16.msra.mxu0 0
        %538 = vmatpush.bf16.msra.mxu0 %v529
        %539 = vmatmul.bf16.gmra.mxu0 %v447
        %v540 = vpop.f32.mrf.mxu0
        %v541 = vadd.f32 %v526, %v540
        %v542 = vpop.f32.mrf.mxu0
        %v543 = vadd.f32 %v526, %v542
        %544 = vmatmul.bf16.gmra.mxu0 %v450
        %v545 = vpop.f32.mrf.mxu0
        %v546 = vadd.f32 %v526, %v545
        %v547 = vpop.f32.mrf.mxu0
        %v548 = vadd.f32 %v526, %v547
        %549 = vmatmul.bf16.gmra.mxu0 %v453
        %v550 = vpop.f32.mrf.mxu0
        %v551 = vadd.f32 %v526, %v550
        %v552 = vpop.f32.mrf.mxu0
        %v553 = vadd.f32 %v526, %v552
        %554 = vmatmul.bf16.gmra.mxu0 %v456
        %v555 = vpop.f32.mrf.mxu0
        %v556 = vadd.f32 %v526, %v555
        %v557 = vpop.f32.mrf.mxu0
        %v558 = vadd.f32 %v526, %v557
        %559 = vmatmul.bf16.gmra.mxu0 %v459
        %v560 = vpop.f32.mrf.mxu0
        %v561 = vadd.f32 %v526, %v560
        %v562 = vpop.f32.mrf.mxu0
        %v563 = vadd.f32 %v526, %v562
        %564 = vmatmul.bf16.gmra.mxu0 %v462
        %v565 = vpop.f32.mrf.mxu0
        %v566 = vadd.f32 %v526, %v565
        %v567 = vpop.f32.mrf.mxu0
        %v568 = vadd.f32 %v526, %v567
        %569 = vmatmul.bf16.gmra.mxu0 %v465
        %v570 = vpop.f32.mrf.mxu0
        %v571 = vadd.f32 %v526, %v570
        %v572 = vpop.f32.mrf.mxu0
        %v573 = vadd.f32 %v526, %v572
        %574 = vmatmul.bf16.gmra.mxu0 %v468
        %v575 = vpop.f32.mrf.mxu0
        %v576 = vadd.f32 %v526, %v575
        %v577 = vpop.f32.mrf.mxu0
        %v578 = vadd.f32 %v526, %v577
        %579 = vdwg.mxu0
        %v580 = vpack.c.bf16 %v541, %v541
        %v581 = vpack.c.bf16 %v543, %v543
        %v582 = vpack.c.bf16 %v546, %v546
        %v583 = vpack.c.bf16 %v548, %v548
        %v584 = vpack.c.bf16 %v551, %v551
        %v585 = vpack.c.bf16 %v553, %v553
        %v586 = vpack.c.bf16 %v556, %v556
        %v587 = vpack.c.bf16 %v558, %v558
        %v588 = vpack.c.bf16 %v561, %v561
        %v589 = vpack.c.bf16 %v563, %v563
        %v590 = vpack.c.bf16 %v566, %v566
        %v591 = vpack.c.bf16 %v568, %v568
        %v592 = vpack.c.bf16 %v571, %v571
        %v593 = vpack.c.bf16 %v573, %v573
        %v594 = vpack.c.bf16 %v576, %v576
        %v595 = vpack.c.bf16 %v578, %v578
        %612 = vrot.lane.b32.xlu0 %v580, 120
        %v613 = vpop.permute.xlu0 %612
        %614 = vrot.lane.b32.xlu0 %v581, 120
        %v615 = vpop.permute.xlu0 %614
        %616 = vrot.lane.b32.xlu0 %v582, 120
        %v617 = vpop.permute.xlu0 %616
        %618 = vrot.lane.b32.xlu0 %v583, 120
        %v619 = vpop.permute.xlu0 %618
        %620 = vrot.lane.b32.xlu0 %v584, 120
        %v621 = vpop.permute.xlu0 %620
        %622 = vrot.lane.b32.xlu0 %v585, 120
        %v623 = vpop.permute.xlu0 %622
        %624 = vrot.lane.b32.xlu0 %v586, 120
        %v625 = vpop.permute.xlu0 %624
        %626 = vrot.lane.b32.xlu0 %v587, 120
        %v627 = vpop.permute.xlu0 %626
        %628 = vrot.lane.b32.xlu0 %v588, 120
        %v629 = vpop.permute.xlu0 %628
        %630 = vrot.lane.b32.xlu0 %v589, 120
        %v631 = vpop.permute.xlu0 %630
        %632 = vrot.lane.b32.xlu0 %v590, 120
        %v633 = vpop.permute.xlu0 %632
        %634 = vrot.lane.b32.xlu0 %v591, 120
        %v635 = vpop.permute.xlu0 %634
        %636 = vrot.lane.b32.xlu0 %v592, 120
        %v637 = vpop.permute.xlu0 %636
        %638 = vrot.lane.b32.xlu0 %v593, 120
        %v639 = vpop.permute.xlu0 %638
        %640 = vrot.lane.b32.xlu0 %v594, 120
        %v641 = vpop.permute.xlu0 %640
        %642 = vrot.lane.b32.xlu0 %v595, 120
        %v643 = vpop.permute.xlu0 %642
        %644 = vrot.lane.b32.xlu0 %v580, 112
        %v645 = vpop.permute.xlu0 %644
        %646 = vrot.lane.b32.xlu0 %v581, 112
        %v647 = vpop.permute.xlu0 %646
        %648 = vrot.lane.b32.xlu0 %v582, 112
        %v649 = vpop.permute.xlu0 %648
        %650 = vrot.lane.b32.xlu0 %v583, 112
        %v651 = vpop.permute.xlu0 %650
        %652 = vrot.lane.b32.xlu0 %v584, 112
        %v653 = vpop.permute.xlu0 %652
        %654 = vrot.lane.b32.xlu0 %v585, 112
        %v655 = vpop.permute.xlu0 %654
        %656 = vrot.lane.b32.xlu0 %v586, 112
        %v657 = vpop.permute.xlu0 %656
        %658 = vrot.lane.b32.xlu0 %v587, 112
        %v659 = vpop.permute.xlu0 %658
        %660 = vrot.lane.b32.xlu0 %v588, 112
        %v661 = vpop.permute.xlu0 %660
        %662 = vrot.lane.b32.xlu0 %v589, 112
        %v663 = vpop.permute.xlu0 %662
        %664 = vrot.lane.b32.xlu0 %v590, 112
        %v665 = vpop.permute.xlu0 %664
        %666 = vrot.lane.b32.xlu0 %v591, 112
        %v667 = vpop.permute.xlu0 %666
        %668 = vrot.lane.b32.xlu0 %v592, 112
        %v669 = vpop.permute.xlu0 %668
        %670 = vrot.lane.b32.xlu0 %v593, 112
        %v671 = vpop.permute.xlu0 %670
        %672 = vrot.lane.b32.xlu0 %v594, 112
        %v673 = vpop.permute.xlu0 %672
        %674 = vrot.lane.b32.xlu0 %v595, 112
        %v675 = vpop.permute.xlu0 %674
        %676 = vrot.lane.b32.xlu0 %v580, 104
        %v677 = vpop.permute.xlu0 %676
        %678 = vrot.lane.b32.xlu0 %v581, 104
        %v679 = vpop.permute.xlu0 %678
        %680 = vrot.lane.b32.xlu0 %v582, 104
        %v681 = vpop.permute.xlu0 %680
        %682 = vrot.lane.b32.xlu0 %v583, 104
        %v683 = vpop.permute.xlu0 %682
        %684 = vrot.lane.b32.xlu0 %v584, 104
        %v685 = vpop.permute.xlu0 %684
        %686 = vrot.lane.b32.xlu0 %v585, 104
        %v687 = vpop.permute.xlu0 %686
        %688 = vrot.lane.b32.xlu0 %v586, 104
        %v689 = vpop.permute.xlu0 %688
        %690 = vrot.lane.b32.xlu0 %v587, 104
        %v691 = vpop.permute.xlu0 %690
        %692 = vrot.lane.b32.xlu0 %v588, 104
        %v693 = vpop.permute.xlu0 %692
        %694 = vrot.lane.b32.xlu0 %v589, 104
        %v695 = vpop.permute.xlu0 %694
        %696 = vrot.lane.b32.xlu0 %v590, 104
        %v697 = vpop.permute.xlu0 %696
        %698 = vrot.lane.b32.xlu0 %v591, 104
        %v699 = vpop.permute.xlu0 %698
        %700 = vrot.lane.b32.xlu0 %v592, 104
        %v701 = vpop.permute.xlu0 %700
        %702 = vrot.lane.b32.xlu0 %v593, 104
        %v703 = vpop.permute.xlu0 %702
        %704 = vrot.lane.b32.xlu0 %v594, 104
        %v705 = vpop.permute.xlu0 %704
        %706 = vrot.lane.b32.xlu0 %v595, 104
        %v707 = vpop.permute.xlu0 %706
        %v708 = vunpack.c.l.b16 %v580
        %v709 = vunpack.c.l.b16 %v581
        %v710 = vunpack.c.l.b16 %v582
        %v711 = vunpack.c.l.b16 %v583
        %v712 = vunpack.c.l.b16 %v584
        %v713 = vunpack.c.l.b16 %v585
        %v714 = vunpack.c.l.b16 %v586
        %v715 = vunpack.c.l.b16 %v587
        %v716 = vunpack.c.l.b16 %v588
        %v717 = vunpack.c.l.b16 %v589
        %v718 = vunpack.c.l.b16 %v590
        %v719 = vunpack.c.l.b16 %v591
        %v720 = vunpack.c.l.b16 %v592
        %v721 = vunpack.c.l.b16 %v593
        %v722 = vunpack.c.l.b16 %v594
        %v723 = vunpack.c.l.b16 %v595
        %v724 = vpack.c.b16 %v709, %v708
        %v725 = vpack.c.b16 %v711, %v710
        %v726 = vpack.c.b16 %v713, %v712
        %v727 = vpack.c.b16 %v715, %v714
        %v728 = vpack.c.b16 %v717, %v716
        %v729 = vpack.c.b16 %v719, %v718
        %v730 = vpack.c.b16 %v721, %v720
        %v731 = vpack.c.b16 %v723, %v722
        %732 = vrot.lane.b32.xlu0 %v724, 96
        %v733 = vpop.permute.xlu0 %732
        %734 = vrot.lane.b32.xlu0 %v725, 96
        %v735 = vpop.permute.xlu0 %734
        %736 = vrot.lane.b32.xlu0 %v726, 96
        %v737 = vpop.permute.xlu0 %736
        %738 = vrot.lane.b32.xlu0 %v727, 96
        %v739 = vpop.permute.xlu0 %738
        %740 = vrot.lane.b32.xlu0 %v728, 96
        %v741 = vpop.permute.xlu0 %740
        %742 = vrot.lane.b32.xlu0 %v729, 96
        %v743 = vpop.permute.xlu0 %742
        %744 = vrot.lane.b32.xlu0 %v730, 96
        %v745 = vpop.permute.xlu0 %744
        %746 = vrot.lane.b32.xlu0 %v731, 96
        %v747 = vpop.permute.xlu0 %746
        %vm748 = vcmask 64512
        %v750 = vsel %vm748, %v724, 0
        %v753 = vsel %vm748, %v725, 0
        %v756 = vsel %vm748, %v726, 0
        %v759 = vsel %vm748, %v727, 0
        %v762 = vsel %vm748, %v728, 0
        %v765 = vsel %vm748, %v729, 0
        %v768 = vsel %vm748, %v730, 0
        %v771 = vsel %vm748, %v731, 0
        %v774 = vsel %vm748, %v733, 0
        %v777 = vsel %vm748, %v735, 0
        %v780 = vsel %vm748, %v737, 0
        %v783 = vsel %vm748, %v739, 0
        %v786 = vsel %vm748, %v741, 0
        %v789 = vsel %vm748, %v743, 0
        %v792 = vsel %vm748, %v745, 0
        %v795 = vsel %vm748, %v747, 0
        %797 = vmatpush.bf16.xpose.msra.mxu0 %v795
        %798 = vmatpush.bf16.xpose.msra.mxu0 %v792
        %799 = vmatpush.bf16.xpose.msra.mxu0 %v789
        %800 = vmatpush.bf16.xpose.msra.mxu0 %v786
        %801 = vmatpush.bf16.xpose.msra.mxu0 %v783
        %802 = vmatpush.bf16.xpose.msra.mxu0 %v780
        %803 = vmatpush.bf16.xpose.msra.mxu0 %v777
        %804 = vmatpush.bf16.xpose.msra.mxu0 %v774
        %805 = vmatmul.bf16.gmra.mxu0 %v750
        %v806 = vpop.f32.mrf.mxu0
        %v807 = vadd.f32 0.0, %v806
        %v808 = vpop.f32.mrf.mxu0
        %v809 = vadd.f32 0.0, %v808
        %810 = vmatmul.bf16.gmra.mxu0 %v753
        %v811 = vpop.f32.mrf.mxu0
        %v812 = vadd.f32 0.0, %v811
        %v813 = vpop.f32.mrf.mxu0
        %v814 = vadd.f32 0.0, %v813
        %815 = vmatmul.bf16.gmra.mxu0 %v756
        %v816 = vpop.f32.mrf.mxu0
        %v817 = vadd.f32 0.0, %v816
        %v818 = vpop.f32.mrf.mxu0
        %v819 = vadd.f32 0.0, %v818
        %820 = vmatmul.bf16.gmra.mxu0 %v759
        %v821 = vpop.f32.mrf.mxu0
        %v822 = vadd.f32 0.0, %v821
        %v823 = vpop.f32.mrf.mxu0
        %v824 = vadd.f32 0.0, %v823
        %825 = vmatmul.bf16.gmra.mxu0 %v762
        %v826 = vpop.f32.mrf.mxu0
        %v827 = vadd.f32 0.0, %v826
        %v828 = vpop.f32.mrf.mxu0
        %v829 = vadd.f32 0.0, %v828
        %830 = vmatmul.bf16.gmra.mxu0 %v765
        %v831 = vpop.f32.mrf.mxu0
        %v832 = vadd.f32 0.0, %v831
        %v833 = vpop.f32.mrf.mxu0
        %v834 = vadd.f32 0.0, %v833
        %835 = vmatmul.bf16.gmra.mxu0 %v768
        %v836 = vpop.f32.mrf.mxu0
        %v837 = vadd.f32 0.0, %v836
        %v838 = vpop.f32.mrf.mxu0
        %v839 = vadd.f32 0.0, %v838
        %840 = vmatmul.bf16.gmra.mxu0 %v771
        %v841 = vpop.f32.mrf.mxu0
        %v842 = vadd.f32 0.0, %v841
        %v843 = vpop.f32.mrf.mxu0
        %v844 = vadd.f32 0.0, %v843
        %845 = vdwg.mxu0
        %v846 = vunpack.c.l.b16 %v613
        %v847 = vunpack.c.l.b16 %v615
        %v848 = vunpack.c.l.b16 %v617
        %v849 = vunpack.c.l.b16 %v619
        %v850 = vunpack.c.l.b16 %v621
        %v851 = vunpack.c.l.b16 %v623
        %v852 = vunpack.c.l.b16 %v625
        %v853 = vunpack.c.l.b16 %v627
        %v854 = vunpack.c.l.b16 %v629
        %v855 = vunpack.c.l.b16 %v631
        %v856 = vunpack.c.l.b16 %v633
        %v857 = vunpack.c.l.b16 %v635
        %v858 = vunpack.c.l.b16 %v637
        %v859 = vunpack.c.l.b16 %v639
        %v860 = vunpack.c.l.b16 %v641
        %v861 = vunpack.c.l.b16 %v643
        %v862 = vpack.c.b16 %v847, %v846
        %v863 = vpack.c.b16 %v849, %v848
        %v864 = vpack.c.b16 %v851, %v850
        %v865 = vpack.c.b16 %v853, %v852
        %v866 = vpack.c.b16 %v855, %v854
        %v867 = vpack.c.b16 %v857, %v856
        %v868 = vpack.c.b16 %v859, %v858
        %v869 = vpack.c.b16 %v861, %v860
        %870 = vrot.lane.b32.xlu0 %v862, 96
        %v871 = vpop.permute.xlu0 %870
        %872 = vrot.lane.b32.xlu0 %v863, 96
        %v873 = vpop.permute.xlu0 %872
        %874 = vrot.lane.b32.xlu0 %v864, 96
        %v875 = vpop.permute.xlu0 %874
        %876 = vrot.lane.b32.xlu0 %v865, 96
        %v877 = vpop.permute.xlu0 %876
        %878 = vrot.lane.b32.xlu0 %v866, 96
        %v879 = vpop.permute.xlu0 %878
        %880 = vrot.lane.b32.xlu0 %v867, 96
        %v881 = vpop.permute.xlu0 %880
        %882 = vrot.lane.b32.xlu0 %v868, 96
        %v883 = vpop.permute.xlu0 %882
        %884 = vrot.lane.b32.xlu0 %v869, 96
        %v885 = vpop.permute.xlu0 %884
        %v887 = vsel %vm748, %v862, 0
        %v890 = vsel %vm748, %v863, 0
        %v893 = vsel %vm748, %v864, 0
        %v896 = vsel %vm748, %v865, 0
        %v899 = vsel %vm748, %v866, 0
        %v902 = vsel %vm748, %v867, 0
        %v905 = vsel %vm748, %v868, 0
        %v908 = vsel %vm748, %v869, 0
        %v911 = vsel %vm748, %v871, 0
        %v914 = vsel %vm748, %v873, 0
        %v917 = vsel %vm748, %v875, 0
        %v920 = vsel %vm748, %v877, 0
        %v923 = vsel %vm748, %v879, 0
        %v926 = vsel %vm748, %v881, 0
        %v929 = vsel %vm748, %v883, 0
        %v932 = vsel %vm748, %v885, 0
        %934 = vmatpush.bf16.xpose.msra.mxu0 %v932
        %935 = vmatpush.bf16.xpose.msra.mxu0 %v929
        %936 = vmatpush.bf16.xpose.msra.mxu0 %v926
        %937 = vmatpush.bf16.xpose.msra.mxu0 %v923
        %938 = vmatpush.bf16.xpose.msra.mxu0 %v920
        %939 = vmatpush.bf16.xpose.msra.mxu0 %v917
        %940 = vmatpush.bf16.xpose.msra.mxu0 %v914
        %941 = vmatpush.bf16.xpose.msra.mxu0 %v911
        %942 = vmatmul.bf16.gmra.mxu0 %v887
        %v943 = vpop.f32.mrf.mxu0
        %v944 = vadd.f32 0.0, %v943
        %v945 = vpop.f32.mrf.mxu0
        %v946 = vadd.f32 0.0, %v945
        %947 = vmatmul.bf16.gmra.mxu0 %v890
        %v948 = vpop.f32.mrf.mxu0
        %v949 = vadd.f32 0.0, %v948
        %v950 = vpop.f32.mrf.mxu0
        %v951 = vadd.f32 0.0, %v950
        %952 = vmatmul.bf16.gmra.mxu0 %v893
        %v953 = vpop.f32.mrf.mxu0
        %v954 = vadd.f32 0.0, %v953
        %v955 = vpop.f32.mrf.mxu0
        %v956 = vadd.f32 0.0, %v955
        %957 = vmatmul.bf16.gmra.mxu0 %v896
        %v958 = vpop.f32.mrf.mxu0
        %v959 = vadd.f32 0.0, %v958
        %v960 = vpop.f32.mrf.mxu0
        %v961 = vadd.f32 0.0, %v960
        %962 = vmatmul.bf16.gmra.mxu0 %v899
        %v963 = vpop.f32.mrf.mxu0
        %v964 = vadd.f32 0.0, %v963
        %v965 = vpop.f32.mrf.mxu0
        %v966 = vadd.f32 0.0, %v965
        %967 = vmatmul.bf16.gmra.mxu0 %v902
        %v968 = vpop.f32.mrf.mxu0
        %v969 = vadd.f32 0.0, %v968
        %v970 = vpop.f32.mrf.mxu0
        %v971 = vadd.f32 0.0, %v970
        %972 = vmatmul.bf16.gmra.mxu0 %v905
        %v973 = vpop.f32.mrf.mxu0
        %v974 = vadd.f32 0.0, %v973
        %v975 = vpop.f32.mrf.mxu0
        %v976 = vadd.f32 0.0, %v975
        %977 = vmatmul.bf16.gmra.mxu0 %v908
        %v978 = vpop.f32.mrf.mxu0
        %v979 = vadd.f32 0.0, %v978
        %v980 = vpop.f32.mrf.mxu0
        %v981 = vadd.f32 0.0, %v980
        %982 = vdwg.mxu0
        %v983 = vunpack.c.l.b16 %v645
        %v984 = vunpack.c.l.b16 %v647
        %v985 = vunpack.c.l.b16 %v649
        %v986 = vunpack.c.l.b16 %v651
        %v987 = vunpack.c.l.b16 %v653
        %v988 = vunpack.c.l.b16 %v655
        %v989 = vunpack.c.l.b16 %v657
        %v990 = vunpack.c.l.b16 %v659
        %v991 = vunpack.c.l.b16 %v661
        %v992 = vunpack.c.l.b16 %v663
        %v993 = vunpack.c.l.b16 %v665
        %v994 = vunpack.c.l.b16 %v667
        %v995 = vunpack.c.l.b16 %v669
        %v996 = vunpack.c.l.b16 %v671
        %v997 = vunpack.c.l.b16 %v673
        %v998 = vunpack.c.l.b16 %v675
        %v999 = vpack.c.b16 %v984, %v983
        %v1000 = vpack.c.b16 %v986, %v985
        %v1001 = vpack.c.b16 %v988, %v987
        %v1002 = vpack.c.b16 %v990, %v989
        %v1003 = vpack.c.b16 %v992, %v991
        %v1004 = vpack.c.b16 %v994, %v993
        %v1005 = vpack.c.b16 %v996, %v995
        %v1006 = vpack.c.b16 %v998, %v997
        %1007 = vrot.lane.b32.xlu0 %v999, 96
        %v1008 = vpop.permute.xlu0 %1007
        %1009 = vrot.lane.b32.xlu0 %v1000, 96
        %v1010 = vpop.permute.xlu0 %1009
        %1011 = vrot.lane.b32.xlu0 %v1001, 96
        %v1012 = vpop.permute.xlu0 %1011
        %1013 = vrot.lane.b32.xlu0 %v1002, 96
        %v1014 = vpop.permute.xlu0 %1013
        %1015 = vrot.lane.b32.xlu0 %v1003, 96
        %v1016 = vpop.permute.xlu0 %1015
        %1017 = vrot.lane.b32.xlu0 %v1004, 96
        %v1018 = vpop.permute.xlu0 %1017
        %1019 = vrot.lane.b32.xlu0 %v1005, 96
        %v1020 = vpop.permute.xlu0 %1019
        %1021 = vrot.lane.b32.xlu0 %v1006, 96
        %v1022 = vpop.permute.xlu0 %1021
        %v1024 = vsel %vm748, %v999, 0
        %v1027 = vsel %vm748, %v1000, 0
        %v1030 = vsel %vm748, %v1001, 0
        %v1033 = vsel %vm748, %v1002, 0
        %v1036 = vsel %vm748, %v1003, 0
        %v1039 = vsel %vm748, %v1004, 0
        %v1042 = vsel %vm748, %v1005, 0
        %v1045 = vsel %vm748, %v1006, 0
        %v1048 = vsel %vm748, %v1008, 0
        %v1051 = vsel %vm748, %v1010, 0
        %v1054 = vsel %vm748, %v1012, 0
        %v1057 = vsel %vm748, %v1014, 0
        %v1060 = vsel %vm748, %v1016, 0
        %v1063 = vsel %vm748, %v1018, 0
        %v1066 = vsel %vm748, %v1020, 0
        %v1069 = vsel %vm748, %v1022, 0
        %1071 = vmatpush.bf16.xpose.msra.mxu0 %v1069
        %1072 = vmatpush.bf16.xpose.msra.mxu0 %v1066
        %1073 = vmatpush.bf16.xpose.msra.mxu0 %v1063
        %1074 = vmatpush.bf16.xpose.msra.mxu0 %v1060
        %1075 = vmatpush.bf16.xpose.msra.mxu0 %v1057
        %1076 = vmatpush.bf16.xpose.msra.mxu0 %v1054
        %1077 = vmatpush.bf16.xpose.msra.mxu0 %v1051
        %1078 = vmatpush.bf16.xpose.msra.mxu0 %v1048
        %1079 = vmatmul.bf16.gmra.mxu0 %v1024
        %v1080 = vpop.f32.mrf.mxu0
        %v1081 = vadd.f32 0.0, %v1080
        %v1082 = vpop.f32.mrf.mxu0
        %v1083 = vadd.f32 0.0, %v1082
        %1084 = vmatmul.bf16.gmra.mxu0 %v1027
        %v1085 = vpop.f32.mrf.mxu0
        %v1086 = vadd.f32 0.0, %v1085
        %v1087 = vpop.f32.mrf.mxu0
        %v1088 = vadd.f32 0.0, %v1087
        %1089 = vmatmul.bf16.gmra.mxu0 %v1030
        %v1090 = vpop.f32.mrf.mxu0
        %v1091 = vadd.f32 0.0, %v1090
        %v1092 = vpop.f32.mrf.mxu0
        %v1093 = vadd.f32 0.0, %v1092
        %1094 = vmatmul.bf16.gmra.mxu0 %v1033
        %v1095 = vpop.f32.mrf.mxu0
        %v1096 = vadd.f32 0.0, %v1095
        %v1097 = vpop.f32.mrf.mxu0
        %v1098 = vadd.f32 0.0, %v1097
        %1099 = vmatmul.bf16.gmra.mxu0 %v1036
        %v1100 = vpop.f32.mrf.mxu0
        %v1101 = vadd.f32 0.0, %v1100
        %v1102 = vpop.f32.mrf.mxu0
        %v1103 = vadd.f32 0.0, %v1102
        %1104 = vmatmul.bf16.gmra.mxu0 %v1039
        %v1105 = vpop.f32.mrf.mxu0
        %v1106 = vadd.f32 0.0, %v1105
        %v1107 = vpop.f32.mrf.mxu0
        %v1108 = vadd.f32 0.0, %v1107
        %1109 = vmatmul.bf16.gmra.mxu0 %v1042
        %v1110 = vpop.f32.mrf.mxu0
        %v1111 = vadd.f32 0.0, %v1110
        %v1112 = vpop.f32.mrf.mxu0
        %v1113 = vadd.f32 0.0, %v1112
        %1114 = vmatmul.bf16.gmra.mxu0 %v1045
        %v1115 = vpop.f32.mrf.mxu0
        %v1116 = vadd.f32 0.0, %v1115
        %v1117 = vpop.f32.mrf.mxu0
        %v1118 = vadd.f32 0.0, %v1117
        %1119 = vdwg.mxu0
        %v1120 = vunpack.c.l.b16 %v677
        %v1121 = vunpack.c.l.b16 %v679
        %v1122 = vunpack.c.l.b16 %v681
        %v1123 = vunpack.c.l.b16 %v683
        %v1124 = vunpack.c.l.b16 %v685
        %v1125 = vunpack.c.l.b16 %v687
        %v1126 = vunpack.c.l.b16 %v689
        %v1127 = vunpack.c.l.b16 %v691
        %v1128 = vunpack.c.l.b16 %v693
        %v1129 = vunpack.c.l.b16 %v695
        %v1130 = vunpack.c.l.b16 %v697
        %v1131 = vunpack.c.l.b16 %v699
        %v1132 = vunpack.c.l.b16 %v701
        %v1133 = vunpack.c.l.b16 %v703
        %v1134 = vunpack.c.l.b16 %v705
        %v1135 = vunpack.c.l.b16 %v707
        %v1136 = vpack.c.b16 %v1121, %v1120
        %v1137 = vpack.c.b16 %v1123, %v1122
        %v1138 = vpack.c.b16 %v1125, %v1124
        %v1139 = vpack.c.b16 %v1127, %v1126
        %v1140 = vpack.c.b16 %v1129, %v1128
        %v1141 = vpack.c.b16 %v1131, %v1130
        %v1142 = vpack.c.b16 %v1133, %v1132
        %v1143 = vpack.c.b16 %v1135, %v1134
        %1144 = vrot.lane.b32.xlu0 %v1136, 96
        %v1145 = vpop.permute.xlu0 %1144
        %1146 = vrot.lane.b32.xlu0 %v1137, 96
        %v1147 = vpop.permute.xlu0 %1146
        %1148 = vrot.lane.b32.xlu0 %v1138, 96
        %v1149 = vpop.permute.xlu0 %1148
        %1150 = vrot.lane.b32.xlu0 %v1139, 96
        %v1151 = vpop.permute.xlu0 %1150
        %1152 = vrot.lane.b32.xlu0 %v1140, 96
        %v1153 = vpop.permute.xlu0 %1152
        %1154 = vrot.lane.b32.xlu0 %v1141, 96
        %v1155 = vpop.permute.xlu0 %1154
        %1156 = vrot.lane.b32.xlu0 %v1142, 96
        %v1157 = vpop.permute.xlu0 %1156
        %1158 = vrot.lane.b32.xlu0 %v1143, 96
        %v1159 = vpop.permute.xlu0 %1158
        %v1161 = vsel %vm748, %v1136, 0
        %v1164 = vsel %vm748, %v1137, 0
        %v1167 = vsel %vm748, %v1138, 0
        %v1170 = vsel %vm748, %v1139, 0
        %v1173 = vsel %vm748, %v1140, 0
        %v1176 = vsel %vm748, %v1141, 0
        %v1179 = vsel %vm748, %v1142, 0
        %v1182 = vsel %vm748, %v1143, 0
        %v1185 = vsel %vm748, %v1145, 0
        %v1188 = vsel %vm748, %v1147, 0
        %v1191 = vsel %vm748, %v1149, 0
        %v1194 = vsel %vm748, %v1151, 0
        %v1197 = vsel %vm748, %v1153, 0
        %v1200 = vsel %vm748, %v1155, 0
        %v1203 = vsel %vm748, %v1157, 0
        %v1206 = vsel %vm748, %v1159, 0
        %1208 = vmatpush.bf16.xpose.msra.mxu0 %v1206
        %1209 = vmatpush.bf16.xpose.msra.mxu0 %v1203
        %1210 = vmatpush.bf16.xpose.msra.mxu0 %v1200
        %1211 = vmatpush.bf16.xpose.msra.mxu0 %v1197
        %1212 = vmatpush.bf16.xpose.msra.mxu0 %v1194
        %1213 = vmatpush.bf16.xpose.msra.mxu0 %v1191
        %1214 = vmatpush.bf16.xpose.msra.mxu0 %v1188
        %1215 = vmatpush.bf16.xpose.msra.mxu0 %v1185
        %1216 = vmatmul.bf16.gmra.mxu0 %v1161
        %v1217 = vpop.f32.mrf.mxu0
        %v1218 = vadd.f32 0.0, %v1217
        %v1219 = vpop.f32.mrf.mxu0
        %v1220 = vadd.f32 0.0, %v1219
        %1221 = vmatmul.bf16.gmra.mxu0 %v1164
        %v1222 = vpop.f32.mrf.mxu0
        %v1223 = vadd.f32 0.0, %v1222
        %v1224 = vpop.f32.mrf.mxu0
        %v1225 = vadd.f32 0.0, %v1224
        %1226 = vmatmul.bf16.gmra.mxu0 %v1167
        %v1227 = vpop.f32.mrf.mxu0
        %v1228 = vadd.f32 0.0, %v1227
        %v1229 = vpop.f32.mrf.mxu0
        %v1230 = vadd.f32 0.0, %v1229
        %1231 = vmatmul.bf16.gmra.mxu0 %v1170
        %v1232 = vpop.f32.mrf.mxu0
        %v1233 = vadd.f32 0.0, %v1232
        %v1234 = vpop.f32.mrf.mxu0
        %v1235 = vadd.f32 0.0, %v1234
        %1236 = vmatmul.bf16.gmra.mxu0 %v1173
        %v1237 = vpop.f32.mrf.mxu0
        %v1238 = vadd.f32 0.0, %v1237
        %v1239 = vpop.f32.mrf.mxu0
        %v1240 = vadd.f32 0.0, %v1239
        %1241 = vmatmul.bf16.gmra.mxu0 %v1176
        %v1242 = vpop.f32.mrf.mxu0
        %v1243 = vadd.f32 0.0, %v1242
        %v1244 = vpop.f32.mrf.mxu0
        %v1245 = vadd.f32 0.0, %v1244
        %1246 = vmatmul.bf16.gmra.mxu0 %v1179
        %v1247 = vpop.f32.mrf.mxu0
        %v1248 = vadd.f32 0.0, %v1247
        %v1249 = vpop.f32.mrf.mxu0
        %v1250 = vadd.f32 0.0, %v1249
        %1251 = vmatmul.bf16.gmra.mxu0 %v1182
        %v1252 = vpop.f32.mrf.mxu0
        %v1253 = vadd.f32 0.0, %v1252
        %v1254 = vpop.f32.mrf.mxu0
        %v1255 = vadd.f32 0.0, %v1254
        %1256 = vdwg.mxu0
        %v1257 = vmul.f32 %v807, 0.35355338
        %v1258 = vmul.f32 %v809, 0.35355338
        %v1259 = vmul.f32 %v812, 0.35355338
        %v1260 = vmul.f32 %v814, 0.35355338
        %v1261 = vmul.f32 %v817, 0.35355338
        %v1262 = vmul.f32 %v819, 0.35355338
        %v1263 = vmul.f32 %v822, 0.35355338
        %v1264 = vmul.f32 %v824, 0.35355338
        %v1265 = vmul.f32 %v827, 0.35355338
        %v1266 = vmul.f32 %v829, 0.35355338
        %v1267 = vmul.f32 %v832, 0.35355338
        %v1268 = vmul.f32 %v834, 0.35355338
        %v1269 = vmul.f32 %v837, 0.35355338
        %v1270 = vmul.f32 %v839, 0.35355338
        %v1271 = vmul.f32 %v842, 0.35355338
        %v1272 = vmul.f32 %v844, 0.35355338
        %v1273 = vmul.f32 %v944, 0.35355338
        %v1274 = vmul.f32 %v946, 0.35355338
        %v1275 = vmul.f32 %v949, 0.35355338
        %v1276 = vmul.f32 %v951, 0.35355338
        %v1277 = vmul.f32 %v954, 0.35355338
        %v1278 = vmul.f32 %v956, 0.35355338
        %v1279 = vmul.f32 %v959, 0.35355338
        %v1280 = vmul.f32 %v961, 0.35355338
        %v1281 = vmul.f32 %v964, 0.35355338
        %v1282 = vmul.f32 %v966, 0.35355338
        %v1283 = vmul.f32 %v969, 0.35355338
        %v1284 = vmul.f32 %v971, 0.35355338
        %v1285 = vmul.f32 %v974, 0.35355338
        %v1286 = vmul.f32 %v976, 0.35355338
        %v1287 = vmul.f32 %v979, 0.35355338
        %v1288 = vmul.f32 %v981, 0.35355338
        %v1289 = vmul.f32 %v1081, 0.35355338
        %v1290 = vmul.f32 %v1083, 0.35355338
        %v1291 = vmul.f32 %v1086, 0.35355338
        %v1292 = vmul.f32 %v1088, 0.35355338
        %v1293 = vmul.f32 %v1091, 0.35355338
        %v1294 = vmul.f32 %v1093, 0.35355338
        %v1295 = vmul.f32 %v1096, 0.35355338
        %v1296 = vmul.f32 %v1098, 0.35355338
        %v1297 = vmul.f32 %v1101, 0.35355338
        %v1298 = vmul.f32 %v1103, 0.35355338
        %v1299 = vmul.f32 %v1106, 0.35355338
        %v1300 = vmul.f32 %v1108, 0.35355338
        %v1301 = vmul.f32 %v1111, 0.35355338
        %v1302 = vmul.f32 %v1113, 0.35355338
        %v1303 = vmul.f32 %v1116, 0.35355338
        %v1304 = vmul.f32 %v1118, 0.35355338
        %v1305 = vmul.f32 %v1218, 0.35355338
        %v1306 = vmul.f32 %v1220, 0.35355338
        %v1307 = vmul.f32 %v1223, 0.35355338
        %v1308 = vmul.f32 %v1225, 0.35355338
        %v1309 = vmul.f32 %v1228, 0.35355338
        %v1310 = vmul.f32 %v1230, 0.35355338
        %v1311 = vmul.f32 %v1233, 0.35355338
        %v1312 = vmul.f32 %v1235, 0.35355338
        %v1313 = vmul.f32 %v1238, 0.35355338
        %v1314 = vmul.f32 %v1240, 0.35355338
        %v1315 = vmul.f32 %v1243, 0.35355338
        %v1316 = vmul.f32 %v1245, 0.35355338
        %v1317 = vmul.f32 %v1248, 0.35355338
        %v1318 = vmul.f32 %v1250, 0.35355338
        %v1319 = vmul.f32 %v1253, 0.35355338
        %v1320 = vmul.f32 %v1255, 0.35355338
        %v1321 = vld [vmem:[%s1] sm:$0xff]
        %v1322 = vld [vmem:[%s1 + $0x8] sm:$0xff]
        %v1323 = vld [vmem:[%s1 + $0x10] sm:$0xff]
        %v1324 = vld [vmem:[%s1 + $0x18] sm:$0xff]
        %v1325 = vld [vmem:[%s1 + $0x20] sm:$0xff]
        %v1326 = vld [vmem:[%s1 + $0x28] sm:$0xff]
        %v1327 = vld [vmem:[%s1 + $0x30] sm:$0xff]
        %v1328 = vld [vmem:[%s1 + $0x38] sm:$0xff]
        %v1329 = vld [vmem:[%s1 + $0x40] sm:$0xff]
        %v1330 = vld [vmem:[%s1 + $0x48] sm:$0xff]
        %v1331 = vld [vmem:[%s1 + $0x50] sm:$0xff]
        %v1332 = vld [vmem:[%s1 + $0x58] sm:$0xff]
        %v1333 = vld [vmem:[%s1 + $0x60] sm:$0xff]
        %v1334 = vld [vmem:[%s1 + $0x68] sm:$0xff]
        %v1335 = vld [vmem:[%s1 + $0x70] sm:$0xff]
        %v1336 = vld [vmem:[%s1 + $0x78] sm:$0xff]
        %v1337 = vadd.f32 %v1257, %v1321
        %v1338 = vadd.f32 %v1258, %v1322
        %v1339 = vadd.f32 %v1259, %v1323
        %v1340 = vadd.f32 %v1260, %v1324
        %v1341 = vadd.f32 %v1261, %v1325
        %v1342 = vadd.f32 %v1262, %v1326
        %v1343 = vadd.f32 %v1263, %v1327
        %v1344 = vadd.f32 %v1264, %v1328
        %v1345 = vadd.f32 %v1265, %v1329
        %v1346 = vadd.f32 %v1266, %v1330
        %v1347 = vadd.f32 %v1267, %v1331
        %v1348 = vadd.f32 %v1268, %v1332
        %v1349 = vadd.f32 %v1269, %v1333
        %v1350 = vadd.f32 %v1270, %v1334
        %v1351 = vadd.f32 %v1271, %v1335
        %v1352 = vadd.f32 %v1272, %v1336
        %v1353 = vadd.f32 %v1273, %v1321
        %v1354 = vadd.f32 %v1274, %v1322
        %v1355 = vadd.f32 %v1275, %v1323
        %v1356 = vadd.f32 %v1276, %v1324
        %v1357 = vadd.f32 %v1277, %v1325
        %v1358 = vadd.f32 %v1278, %v1326
        %v1359 = vadd.f32 %v1279, %v1327
        %v1360 = vadd.f32 %v1280, %v1328
        %v1361 = vadd.f32 %v1281, %v1329
        %v1362 = vadd.f32 %v1282, %v1330
        %v1363 = vadd.f32 %v1283, %v1331
        %v1364 = vadd.f32 %v1284, %v1332
        %v1365 = vadd.f32 %v1285, %v1333
        %v1366 = vadd.f32 %v1286, %v1334
        %v1367 = vadd.f32 %v1287, %v1335
        %v1368 = vadd.f32 %v1288, %v1336
        %v1369 = vadd.f32 %v1289, %v1321
        %v1370 = vadd.f32 %v1290, %v1322
        %v1371 = vadd.f32 %v1291, %v1323
        %v1372 = vadd.f32 %v1292, %v1324
        %v1373 = vadd.f32 %v1293, %v1325
        %v1374 = vadd.f32 %v1294, %v1326
        %v1375 = vadd.f32 %v1295, %v1327
        %v1376 = vadd.f32 %v1296, %v1328
        %v1377 = vadd.f32 %v1297, %v1329
        %v1378 = vadd.f32 %v1298, %v1330
        %v1379 = vadd.f32 %v1299, %v1331
        %v1380 = vadd.f32 %v1300, %v1332
        %v1381 = vadd.f32 %v1301, %v1333
        %v1382 = vadd.f32 %v1302, %v1334
        %v1383 = vadd.f32 %v1303, %v1335
        %v1384 = vadd.f32 %v1304, %v1336
        %v1385 = vadd.f32 %v1305, %v1321
        %v1386 = vadd.f32 %v1306, %v1322
        %v1387 = vadd.f32 %v1307, %v1323
        %v1388 = vadd.f32 %v1308, %v1324
        %v1389 = vadd.f32 %v1309, %v1325
        %v1390 = vadd.f32 %v1310, %v1326
        %v1391 = vadd.f32 %v1311, %v1327
        %v1392 = vadd.f32 %v1312, %v1328
        %v1393 = vadd.f32 %v1313, %v1329
        %v1394 = vadd.f32 %v1314, %v1330
        %v1395 = vadd.f32 %v1315, %v1331
        %v1396 = vadd.f32 %v1316, %v1332
        %v1397 = vadd.f32 %v1317, %v1333
        %v1398 = vadd.f32 %v1318, %v1334
        %v1399 = vadd.f32 %v1319, %v1335
        %v1400 = vadd.f32 %v1320, %v1336
        %1401 = vmax.xlane.f32.xlu0 %v1337
        %v1402 = vpop.xlane.xlu0 %1401
        %1403 = vmax.xlane.f32.xlu0 %v1338
        %v1404 = vpop.xlane.xlu0 %1403
        %1405 = vmax.xlane.f32.xlu0 %v1339
        %v1406 = vpop.xlane.xlu0 %1405
        %1407 = vmax.xlane.f32.xlu0 %v1340
        %v1408 = vpop.xlane.xlu0 %1407
        %1409 = vmax.xlane.f32.xlu0 %v1341
        %v1410 = vpop.xlane.xlu0 %1409
        %1411 = vmax.xlane.f32.xlu0 %v1342
        %v1412 = vpop.xlane.xlu0 %1411
        %1413 = vmax.xlane.f32.xlu0 %v1343
        %v1414 = vpop.xlane.xlu0 %1413
        %1415 = vmax.xlane.f32.xlu0 %v1344
        %v1416 = vpop.xlane.xlu0 %1415
        %1417 = vmax.xlane.f32.xlu0 %v1345
        %v1418 = vpop.xlane.xlu0 %1417
        %1419 = vmax.xlane.f32.xlu0 %v1346
        %v1420 = vpop.xlane.xlu0 %1419
        %1421 = vmax.xlane.f32.xlu0 %v1347
        %v1422 = vpop.xlane.xlu0 %1421
        %1423 = vmax.xlane.f32.xlu0 %v1348
        %v1424 = vpop.xlane.xlu0 %1423
        %1425 = vmax.xlane.f32.xlu0 %v1349
        %v1426 = vpop.xlane.xlu0 %1425
        %1427 = vmax.xlane.f32.xlu0 %v1350
        %v1428 = vpop.xlane.xlu0 %1427
        %1429 = vmax.xlane.f32.xlu0 %v1351
        %v1430 = vpop.xlane.xlu0 %1429
        %1431 = vmax.xlane.f32.xlu0 %v1352
        %v1432 = vpop.xlane.xlu0 %1431
        %1433 = vmax.xlane.f32.xlu0 %v1353
        %v1434 = vpop.xlane.xlu0 %1433
        %1435 = vmax.xlane.f32.xlu0 %v1354
        %v1436 = vpop.xlane.xlu0 %1435
        %1437 = vmax.xlane.f32.xlu0 %v1355
        %v1438 = vpop.xlane.xlu0 %1437
        %1439 = vmax.xlane.f32.xlu0 %v1356
        %v1440 = vpop.xlane.xlu0 %1439
        %1441 = vmax.xlane.f32.xlu0 %v1357
        %v1442 = vpop.xlane.xlu0 %1441
        %1443 = vmax.xlane.f32.xlu0 %v1358
        %v1444 = vpop.xlane.xlu0 %1443
        %1445 = vmax.xlane.f32.xlu0 %v1359
        %v1446 = vpop.xlane.xlu0 %1445
        %1447 = vmax.xlane.f32.xlu0 %v1360
        %v1448 = vpop.xlane.xlu0 %1447
        %1449 = vmax.xlane.f32.xlu0 %v1361
        %v1450 = vpop.xlane.xlu0 %1449
        %1451 = vmax.xlane.f32.xlu0 %v1362
        %v1452 = vpop.xlane.xlu0 %1451
        %1453 = vmax.xlane.f32.xlu0 %v1363
        %v1454 = vpop.xlane.xlu0 %1453
        %1455 = vmax.xlane.f32.xlu0 %v1364
        %v1456 = vpop.xlane.xlu0 %1455
        %1457 = vmax.xlane.f32.xlu0 %v1365
        %v1458 = vpop.xlane.xlu0 %1457
        %1459 = vmax.xlane.f32.xlu0 %v1366
        %v1460 = vpop.xlane.xlu0 %1459
        %1461 = vmax.xlane.f32.xlu0 %v1367
        %v1462 = vpop.xlane.xlu0 %1461
        %1463 = vmax.xlane.f32.xlu0 %v1368
        %v1464 = vpop.xlane.xlu0 %1463
        %1465 = vmax.xlane.f32.xlu0 %v1369
        %v1466 = vpop.xlane.xlu0 %1465
        %1467 = vmax.xlane.f32.xlu0 %v1370
        %v1468 = vpop.xlane.xlu0 %1467
        %1469 = vmax.xlane.f32.xlu0 %v1371
        %v1470 = vpop.xlane.xlu0 %1469
        %1471 = vmax.xlane.f32.xlu0 %v1372
        %v1472 = vpop.xlane.xlu0 %1471
        %1473 = vmax.xlane.f32.xlu0 %v1373
        %v1474 = vpop.xlane.xlu0 %1473
        %1475 = vmax.xlane.f32.xlu0 %v1374
        %v1476 = vpop.xlane.xlu0 %1475
        %1477 = vmax.xlane.f32.xlu0 %v1375
        %v1478 = vpop.xlane.xlu0 %1477
        %1479 = vmax.xlane.f32.xlu0 %v1376
        %v1480 = vpop.xlane.xlu0 %1479
        %1481 = vmax.xlane.f32.xlu0 %v1377
        %v1482 = vpop.xlane.xlu0 %1481
        %1483 = vmax.xlane.f32.xlu0 %v1378
        %v1484 = vpop.xlane.xlu0 %1483
        %1485 = vmax.xlane.f32.xlu0 %v1379
        %v1486 = vpop.xlane.xlu0 %1485
        %1487 = vmax.xlane.f32.xlu0 %v1380
        %v1488 = vpop.xlane.xlu0 %1487
        %1489 = vmax.xlane.f32.xlu0 %v1381
        %v1490 = vpop.xlane.xlu0 %1489
        %1491 = vmax.xlane.f32.xlu0 %v1382
        %v1492 = vpop.xlane.xlu0 %1491
        %1493 = vmax.xlane.f32.xlu0 %v1383
        %v1494 = vpop.xlane.xlu0 %1493
        %1495 = vmax.xlane.f32.xlu0 %v1384
        %v1496 = vpop.xlane.xlu0 %1495
        %1497 = vmax.xlane.f32.xlu0 %v1385
        %v1498 = vpop.xlane.xlu0 %1497
        %1499 = vmax.xlane.f32.xlu0 %v1386
        %v1500 = vpop.xlane.xlu0 %1499
        %1501 = vmax.xlane.f32.xlu0 %v1387
        %v1502 = vpop.xlane.xlu0 %1501
        %1503 = vmax.xlane.f32.xlu0 %v1388
        %v1504 = vpop.xlane.xlu0 %1503
        %1505 = vmax.xlane.f32.xlu0 %v1389
        %v1506 = vpop.xlane.xlu0 %1505
        %1507 = vmax.xlane.f32.xlu0 %v1390
        %v1508 = vpop.xlane.xlu0 %1507
        %1509 = vmax.xlane.f32.xlu0 %v1391
        %v1510 = vpop.xlane.xlu0 %1509
        %1511 = vmax.xlane.f32.xlu0 %v1392
        %v1512 = vpop.xlane.xlu0 %1511
        %1513 = vmax.xlane.f32.xlu0 %v1393
        %v1514 = vpop.xlane.xlu0 %1513
        %1515 = vmax.xlane.f32.xlu0 %v1394
        %v1516 = vpop.xlane.xlu0 %1515
        %1517 = vmax.xlane.f32.xlu0 %v1395
        %v1518 = vpop.xlane.xlu0 %1517
        %1519 = vmax.xlane.f32.xlu0 %v1396
        %v1520 = vpop.xlane.xlu0 %1519
        %1521 = vmax.xlane.f32.xlu0 %v1397
        %v1522 = vpop.xlane.xlu0 %1521
        %1523 = vmax.xlane.f32.xlu0 %v1398
        %v1524 = vpop.xlane.xlu0 %1523
        %1525 = vmax.xlane.f32.xlu0 %v1399
        %v1526 = vpop.xlane.xlu0 %1525
        %1527 = vmax.xlane.f32.xlu0 %v1400
        %v1528 = vpop.xlane.xlu0 %1527
        %v1529 = vsub.f32 %v1337, %v1402
        %v1530 = vsub.f32 %v1338, %v1404
        %v1531 = vsub.f32 %v1339, %v1406
        %v1532 = vsub.f32 %v1340, %v1408
        %v1533 = vsub.f32 %v1341, %v1410
        %v1534 = vsub.f32 %v1342, %v1412
        %v1535 = vsub.f32 %v1343, %v1414
        %v1536 = vsub.f32 %v1344, %v1416
        %v1537 = vsub.f32 %v1345, %v1418
        %v1538 = vsub.f32 %v1346, %v1420
        %v1539 = vsub.f32 %v1347, %v1422
        %v1540 = vsub.f32 %v1348, %v1424
        %v1541 = vsub.f32 %v1349, %v1426
        %v1542 = vsub.f32 %v1350, %v1428
        %v1543 = vsub.f32 %v1351, %v1430
        %v1544 = vsub.f32 %v1352, %v1432
        %v1545 = vsub.f32 %v1353, %v1434
        %v1546 = vsub.f32 %v1354, %v1436
        %v1547 = vsub.f32 %v1355, %v1438
        %v1548 = vsub.f32 %v1356, %v1440
        %v1549 = vsub.f32 %v1357, %v1442
        %v1550 = vsub.f32 %v1358, %v1444
        %v1551 = vsub.f32 %v1359, %v1446
        %v1552 = vsub.f32 %v1360, %v1448
        %v1553 = vsub.f32 %v1361, %v1450
        %v1554 = vsub.f32 %v1362, %v1452
        %v1555 = vsub.f32 %v1363, %v1454
        %v1556 = vsub.f32 %v1364, %v1456
        %v1557 = vsub.f32 %v1365, %v1458
        %v1558 = vsub.f32 %v1366, %v1460
        %v1559 = vsub.f32 %v1367, %v1462
        %v1560 = vsub.f32 %v1368, %v1464
        %v1561 = vsub.f32 %v1369, %v1466
        %v1562 = vsub.f32 %v1370, %v1468
        %v1563 = vsub.f32 %v1371, %v1470
        %v1564 = vsub.f32 %v1372, %v1472
        %v1565 = vsub.f32 %v1373, %v1474
        %v1566 = vsub.f32 %v1374, %v1476
        %v1567 = vsub.f32 %v1375, %v1478
        %v1568 = vsub.f32 %v1376, %v1480
        %v1569 = vsub.f32 %v1377, %v1482
        %v1570 = vsub.f32 %v1378, %v1484
        %v1571 = vsub.f32 %v1379, %v1486
        %v1572 = vsub.f32 %v1380, %v1488
        %v1573 = vsub.f32 %v1381, %v1490
        %v1574 = vsub.f32 %v1382, %v1492
        %v1575 = vsub.f32 %v1383, %v1494
        %v1576 = vsub.f32 %v1384, %v1496
        %v1577 = vsub.f32 %v1385, %v1498
        %v1578 = vsub.f32 %v1386, %v1500
        %v1579 = vsub.f32 %v1387, %v1502
        %v1580 = vsub.f32 %v1388, %v1504
        %v1581 = vsub.f32 %v1389, %v1506
        %v1582 = vsub.f32 %v1390, %v1508
        %v1583 = vsub.f32 %v1391, %v1510
        %v1584 = vsub.f32 %v1392, %v1512
        %v1585 = vsub.f32 %v1393, %v1514
        %v1586 = vsub.f32 %v1394, %v1516
        %v1587 = vsub.f32 %v1395, %v1518
        %v1588 = vsub.f32 %v1396, %v1520
        %v1589 = vsub.f32 %v1397, %v1522
        %v1590 = vsub.f32 %v1398, %v1524
        %v1591 = vsub.f32 %v1399, %v1526
        %v1592 = vsub.f32 %v1400, %v1528
        %v1593 = vmul.f32 %v1529, 1.442695
        %v1594 = vpow.pop %v1593
        %v1595 = vmul.f32 %v1530, 1.442695
        %v1596 = vpow.pop %v1595
        %v1597 = vmul.f32 %v1531, 1.442695
        %v1598 = vpow.pop %v1597
        %v1599 = vmul.f32 %v1532, 1.442695
        %v1600 = vpow.pop %v1599
        %v1601 = vmul.f32 %v1533, 1.442695
        %v1602 = vpow.pop %v1601
        %v1603 = vmul.f32 %v1534, 1.442695
        %v1604 = vpow.pop %v1603
        %v1605 = vmul.f32 %v1535, 1.442695
        %v1606 = vpow.pop %v1605
        %v1607 = vmul.f32 %v1536, 1.442695
        %v1608 = vpow.pop %v1607
        %v1609 = vmul.f32 %v1537, 1.442695
        %v1610 = vpow.pop %v1609
        %v1611 = vmul.f32 %v1538, 1.442695
        %v1612 = vpow.pop %v1611
        %v1613 = vmul.f32 %v1539, 1.442695
        %v1614 = vpow.pop %v1613
        %v1615 = vmul.f32 %v1540, 1.442695
        %v1616 = vpow.pop %v1615
        %v1617 = vmul.f32 %v1541, 1.442695
        %v1618 = vpow.pop %v1617
        %v1619 = vmul.f32 %v1542, 1.442695
        %v1620 = vpow.pop %v1619
        %v1621 = vmul.f32 %v1543, 1.442695
        %v1622 = vpow.pop %v1621
        %v1623 = vmul.f32 %v1544, 1.442695
        %v1624 = vpow.pop %v1623
        %v1625 = vmul.f32 %v1545, 1.442695
        %v1626 = vpow.pop %v1625
        %v1627 = vmul.f32 %v1546, 1.442695
        %v1628 = vpow.pop %v1627
        %v1629 = vmul.f32 %v1547, 1.442695
        %v1630 = vpow.pop %v1629
        %v1631 = vmul.f32 %v1548, 1.442695
        %v1632 = vpow.pop %v1631
        %v1633 = vmul.f32 %v1549, 1.442695
        %v1634 = vpow.pop %v1633
        %v1635 = vmul.f32 %v1550, 1.442695
        %v1636 = vpow.pop %v1635
        %v1637 = vmul.f32 %v1551, 1.442695
        %v1638 = vpow.pop %v1637
        %v1639 = vmul.f32 %v1552, 1.442695
        %v1640 = vpow.pop %v1639
        %v1641 = vmul.f32 %v1553, 1.442695
        %v1642 = vpow.pop %v1641
        %v1643 = vmul.f32 %v1554, 1.442695
        %v1644 = vpow.pop %v1643
        %v1645 = vmul.f32 %v1555, 1.442695
        %v1646 = vpow.pop %v1645
        %v1647 = vmul.f32 %v1556, 1.442695
        %v1648 = vpow.pop %v1647
        %v1649 = vmul.f32 %v1557, 1.442695
        %v1650 = vpow.pop %v1649
        %v1651 = vmul.f32 %v1558, 1.442695
        %v1652 = vpow.pop %v1651
        %v1653 = vmul.f32 %v1559, 1.442695
        %v1654 = vpow.pop %v1653
        %v1655 = vmul.f32 %v1560, 1.442695
        %v1656 = vpow.pop %v1655
        %v1657 = vmul.f32 %v1561, 1.442695
        %v1658 = vpow.pop %v1657
        %v1659 = vmul.f32 %v1562, 1.442695
        %v1660 = vpow.pop %v1659
        %v1661 = vmul.f32 %v1563, 1.442695
        %v1662 = vpow.pop %v1661
        %v1663 = vmul.f32 %v1564, 1.442695
        %v1664 = vpow.pop %v1663
        %v1665 = vmul.f32 %v1565, 1.442695
        %v1666 = vpow.pop %v1665
        %v1667 = vmul.f32 %v1566, 1.442695
        %v1668 = vpow.pop %v1667
        %v1669 = vmul.f32 %v1567, 1.442695
        %v1670 = vpow.pop %v1669
        %v1671 = vmul.f32 %v1568, 1.442695
        %v1672 = vpow.pop %v1671
        %v1673 = vmul.f32 %v1569, 1.442695
        %v1674 = vpow.pop %v1673
        %v1675 = vmul.f32 %v1570, 1.442695
        %v1676 = vpow.pop %v1675
        %v1677 = vmul.f32 %v1571, 1.442695
        %v1678 = vpow.pop %v1677
        %v1679 = vmul.f32 %v1572, 1.442695
        %v1680 = vpow.pop %v1679
        %v1681 = vmul.f32 %v1573, 1.442695
        %v1682 = vpow.pop %v1681
        %v1683 = vmul.f32 %v1574, 1.442695
        %v1684 = vpow.pop %v1683
        %v1685 = vmul.f32 %v1575, 1.442695
        %v1686 = vpow.pop %v1685
        %v1687 = vmul.f32 %v1576, 1.442695
        %v1688 = vpow.pop %v1687
        %v1689 = vmul.f32 %v1577, 1.442695
        %v1690 = vpow.pop %v1689
        %v1691 = vmul.f32 %v1578, 1.442695
        %v1692 = vpow.pop %v1691
        %v1693 = vmul.f32 %v1579, 1.442695
        %v1694 = vpow.pop %v1693
        %v1695 = vmul.f32 %v1580, 1.442695
        %v1696 = vpow.pop %v1695
        %v1697 = vmul.f32 %v1581, 1.442695
        %v1698 = vpow.pop %v1697
        %v1699 = vmul.f32 %v1582, 1.442695
        %v1700 = vpow.pop %v1699
        %v1701 = vmul.f32 %v1583, 1.442695
        %v1702 = vpow.pop %v1701
        %v1703 = vmul.f32 %v1584, 1.442695
        %v1704 = vpow.pop %v1703
        %v1705 = vmul.f32 %v1585, 1.442695
        %v1706 = vpow.pop %v1705
        %v1707 = vmul.f32 %v1586, 1.442695
        %v1708 = vpow.pop %v1707
        %v1709 = vmul.f32 %v1587, 1.442695
        %v1710 = vpow.pop %v1709
        %v1711 = vmul.f32 %v1588, 1.442695
        %v1712 = vpow.pop %v1711
        %v1713 = vmul.f32 %v1589, 1.442695
        %v1714 = vpow.pop %v1713
        %v1715 = vmul.f32 %v1590, 1.442695
        %v1716 = vpow.pop %v1715
        %v1717 = vmul.f32 %v1591, 1.442695
        %v1718 = vpow.pop %v1717
        %v1719 = vmul.f32 %v1592, 1.442695
        %v1720 = vpow.pop %v1719
        %1721 = vadd.xlane.f32.xlu0 %v1594
        %v1722 = vpop.xlane.xlu0 %1721
        %1723 = vadd.xlane.f32.xlu0 %v1596
        %v1724 = vpop.xlane.xlu0 %1723
        %1725 = vadd.xlane.f32.xlu0 %v1598
        %v1726 = vpop.xlane.xlu0 %1725
        %1727 = vadd.xlane.f32.xlu0 %v1600
        %v1728 = vpop.xlane.xlu0 %1727
        %1729 = vadd.xlane.f32.xlu0 %v1602
        %v1730 = vpop.xlane.xlu0 %1729
        %1731 = vadd.xlane.f32.xlu0 %v1604
        %v1732 = vpop.xlane.xlu0 %1731
        %1733 = vadd.xlane.f32.xlu0 %v1606
        %v1734 = vpop.xlane.xlu0 %1733
        %1735 = vadd.xlane.f32.xlu0 %v1608
        %v1736 = vpop.xlane.xlu0 %1735
        %1737 = vadd.xlane.f32.xlu0 %v1610
        %v1738 = vpop.xlane.xlu0 %1737
        %1739 = vadd.xlane.f32.xlu0 %v1612
        %v1740 = vpop.xlane.xlu0 %1739
        %1741 = vadd.xlane.f32.xlu0 %v1614
        %v1742 = vpop.xlane.xlu0 %1741
        %1743 = vadd.xlane.f32.xlu0 %v1616
        %v1744 = vpop.xlane.xlu0 %1743
        %1745 = vadd.xlane.f32.xlu0 %v1618
        %v1746 = vpop.xlane.xlu0 %1745
        %1747 = vadd.xlane.f32.xlu0 %v1620
        %v1748 = vpop.xlane.xlu0 %1747
        %1749 = vadd.xlane.f32.xlu0 %v1622
        %v1750 = vpop.xlane.xlu0 %1749
        %1751 = vadd.xlane.f32.xlu0 %v1624
        %v1752 = vpop.xlane.xlu0 %1751
        %1753 = vadd.xlane.f32.xlu0 %v1626
        %v1754 = vpop.xlane.xlu0 %1753
        %1755 = vadd.xlane.f32.xlu0 %v1628
        %v1756 = vpop.xlane.xlu0 %1755
        %1757 = vadd.xlane.f32.xlu0 %v1630
        %v1758 = vpop.xlane.xlu0 %1757
        %1759 = vadd.xlane.f32.xlu0 %v1632
        %v1760 = vpop.xlane.xlu0 %1759
        %1761 = vadd.xlane.f32.xlu0 %v1634
        %v1762 = vpop.xlane.xlu0 %1761
        %1763 = vadd.xlane.f32.xlu0 %v1636
        %v1764 = vpop.xlane.xlu0 %1763
        %1765 = vadd.xlane.f32.xlu0 %v1638
        %v1766 = vpop.xlane.xlu0 %1765
        %1767 = vadd.xlane.f32.xlu0 %v1640
        %v1768 = vpop.xlane.xlu0 %1767
        %1769 = vadd.xlane.f32.xlu0 %v1642
        %v1770 = vpop.xlane.xlu0 %1769
        %1771 = vadd.xlane.f32.xlu0 %v1644
        %v1772 = vpop.xlane.xlu0 %1771
        %1773 = vadd.xlane.f32.xlu0 %v1646
        %v1774 = vpop.xlane.xlu0 %1773
        %1775 = vadd.xlane.f32.xlu0 %v1648
        %v1776 = vpop.xlane.xlu0 %1775
        %1777 = vadd.xlane.f32.xlu0 %v1650
        %v1778 = vpop.xlane.xlu0 %1777
        %1779 = vadd.xlane.f32.xlu0 %v1652
        %v1780 = vpop.xlane.xlu0 %1779
        %1781 = vadd.xlane.f32.xlu0 %v1654
        %v1782 = vpop.xlane.xlu0 %1781
        %1783 = vadd.xlane.f32.xlu0 %v1656
        %v1784 = vpop.xlane.xlu0 %1783
        %1785 = vadd.xlane.f32.xlu0 %v1658
        %v1786 = vpop.xlane.xlu0 %1785
        %1787 = vadd.xlane.f32.xlu0 %v1660
        %v1788 = vpop.xlane.xlu0 %1787
        %1789 = vadd.xlane.f32.xlu0 %v1662
        %v1790 = vpop.xlane.xlu0 %1789
        %1791 = vadd.xlane.f32.xlu0 %v1664
        %v1792 = vpop.xlane.xlu0 %1791
        %1793 = vadd.xlane.f32.xlu0 %v1666
        %v1794 = vpop.xlane.xlu0 %1793
        %1795 = vadd.xlane.f32.xlu0 %v1668
        %v1796 = vpop.xlane.xlu0 %1795
        %1797 = vadd.xlane.f32.xlu0 %v1670
        %v1798 = vpop.xlane.xlu0 %1797
        %1799 = vadd.xlane.f32.xlu0 %v1672
        %v1800 = vpop.xlane.xlu0 %1799
        %1801 = vadd.xlane.f32.xlu0 %v1674
        %v1802 = vpop.xlane.xlu0 %1801
        %1803 = vadd.xlane.f32.xlu0 %v1676
        %v1804 = vpop.xlane.xlu0 %1803
        %1805 = vadd.xlane.f32.xlu0 %v1678
        %v1806 = vpop.xlane.xlu0 %1805
        %1807 = vadd.xlane.f32.xlu0 %v1680
        %v1808 = vpop.xlane.xlu0 %1807
        %1809 = vadd.xlane.f32.xlu0 %v1682
        %v1810 = vpop.xlane.xlu0 %1809
        %1811 = vadd.xlane.f32.xlu0 %v1684
        %v1812 = vpop.xlane.xlu0 %1811
        %1813 = vadd.xlane.f32.xlu0 %v1686
        %v1814 = vpop.xlane.xlu0 %1813
        %1815 = vadd.xlane.f32.xlu0 %v1688
        %v1816 = vpop.xlane.xlu0 %1815
        %1817 = vadd.xlane.f32.xlu0 %v1690
        %v1818 = vpop.xlane.xlu0 %1817
        %1819 = vadd.xlane.f32.xlu0 %v1692
        %v1820 = vpop.xlane.xlu0 %1819
        %1821 = vadd.xlane.f32.xlu0 %v1694
        %v1822 = vpop.xlane.xlu0 %1821
        %1823 = vadd.xlane.f32.xlu0 %v1696
        %v1824 = vpop.xlane.xlu0 %1823
        %1825 = vadd.xlane.f32.xlu0 %v1698
        %v1826 = vpop.xlane.xlu0 %1825
        %1827 = vadd.xlane.f32.xlu0 %v1700
        %v1828 = vpop.xlane.xlu0 %1827
        %1829 = vadd.xlane.f32.xlu0 %v1702
        %v1830 = vpop.xlane.xlu0 %1829
        %1831 = vadd.xlane.f32.xlu0 %v1704
        %v1832 = vpop.xlane.xlu0 %1831
        %1833 = vadd.xlane.f32.xlu0 %v1706
        %v1834 = vpop.xlane.xlu0 %1833
        %1835 = vadd.xlane.f32.xlu0 %v1708
        %v1836 = vpop.xlane.xlu0 %1835
        %1837 = vadd.xlane.f32.xlu0 %v1710
        %v1838 = vpop.xlane.xlu0 %1837
        %1839 = vadd.xlane.f32.xlu0 %v1712
        %v1840 = vpop.xlane.xlu0 %1839
        %1841 = vadd.xlane.f32.xlu0 %v1714
        %v1842 = vpop.xlane.xlu0 %1841
        %1843 = vadd.xlane.f32.xlu0 %v1716
        %v1844 = vpop.xlane.xlu0 %1843
        %1845 = vadd.xlane.f32.xlu0 %v1718
        %v1846 = vpop.xlane.xlu0 %1845
        %1847 = vadd.xlane.f32.xlu0 %v1720
        %v1848 = vpop.xlane.xlu0 %1847
        %v1849 = vrcp.pop %v1722
        %v1850 = vrcp.pop %v1724
        %v1851 = vrcp.pop %v1726
        %v1852 = vrcp.pop %v1728
        %v1853 = vrcp.pop %v1730
        %v1854 = vrcp.pop %v1732
        %v1855 = vrcp.pop %v1734
        %v1856 = vrcp.pop %v1736
        %v1857 = vrcp.pop %v1738
        %v1858 = vrcp.pop %v1740
        %v1859 = vrcp.pop %v1742
        %v1860 = vrcp.pop %v1744
        %v1861 = vrcp.pop %v1746
        %v1862 = vrcp.pop %v1748
        %v1863 = vrcp.pop %v1750
        %v1864 = vrcp.pop %v1752
        %v1865 = vrcp.pop %v1754
        %v1866 = vrcp.pop %v1756
        %v1867 = vrcp.pop %v1758
        %v1868 = vrcp.pop %v1760
        %v1869 = vrcp.pop %v1762
        %v1870 = vrcp.pop %v1764
        %v1871 = vrcp.pop %v1766
        %v1872 = vrcp.pop %v1768
        %v1873 = vrcp.pop %v1770
        %v1874 = vrcp.pop %v1772
        %v1875 = vrcp.pop %v1774
        %v1876 = vrcp.pop %v1776
        %v1877 = vrcp.pop %v1778
        %v1878 = vrcp.pop %v1780
        %v1879 = vrcp.pop %v1782
        %v1880 = vrcp.pop %v1784
        %v1881 = vrcp.pop %v1786
        %v1882 = vrcp.pop %v1788
        %v1883 = vrcp.pop %v1790
        %v1884 = vrcp.pop %v1792
        %v1885 = vrcp.pop %v1794
        %v1886 = vrcp.pop %v1796
        %v1887 = vrcp.pop %v1798
        %v1888 = vrcp.pop %v1800
        %v1889 = vrcp.pop %v1802
        %v1890 = vrcp.pop %v1804
        %v1891 = vrcp.pop %v1806
        %v1892 = vrcp.pop %v1808
        %v1893 = vrcp.pop %v1810
        %v1894 = vrcp.pop %v1812
        %v1895 = vrcp.pop %v1814
        %v1896 = vrcp.pop %v1816
        %v1897 = vrcp.pop %v1818
        %v1898 = vrcp.pop %v1820
        %v1899 = vrcp.pop %v1822
        %v1900 = vrcp.pop %v1824
        %v1901 = vrcp.pop %v1826
        %v1902 = vrcp.pop %v1828
        %v1903 = vrcp.pop %v1830
        %v1904 = vrcp.pop %v1832
        %v1905 = vrcp.pop %v1834
        %v1906 = vrcp.pop %v1836
        %v1907 = vrcp.pop %v1838
        %v1908 = vrcp.pop %v1840
        %v1909 = vrcp.pop %v1842
        %v1910 = vrcp.pop %v1844
        %v1911 = vrcp.pop %v1846
        %v1912 = vrcp.pop %v1848
        %v1913 = vmul.f32 %v1594, %v1849
        %v1914 = vmul.f32 %v1596, %v1850
        %v1915 = vmul.f32 %v1598, %v1851
        %v1916 = vmul.f32 %v1600, %v1852
        %v1917 = vmul.f32 %v1602, %v1853
        %v1918 = vmul.f32 %v1604, %v1854
        %v1919 = vmul.f32 %v1606, %v1855
        %v1920 = vmul.f32 %v1608, %v1856
        %v1921 = vmul.f32 %v1610, %v1857
        %v1922 = vmul.f32 %v1612, %v1858
        %v1923 = vmul.f32 %v1614, %v1859
        %v1924 = vmul.f32 %v1616, %v1860
        %v1925 = vmul.f32 %v1618, %v1861
        %v1926 = vmul.f32 %v1620, %v1862
        %v1927 = vmul.f32 %v1622, %v1863
        %v1928 = vmul.f32 %v1624, %v1864
        %v1929 = vmul.f32 %v1626, %v1865
        %v1930 = vmul.f32 %v1628, %v1866
        %v1931 = vmul.f32 %v1630, %v1867
        %v1932 = vmul.f32 %v1632, %v1868
        %v1933 = vmul.f32 %v1634, %v1869
        %v1934 = vmul.f32 %v1636, %v1870
        %v1935 = vmul.f32 %v1638, %v1871
        %v1936 = vmul.f32 %v1640, %v1872
        %v1937 = vmul.f32 %v1642, %v1873
        %v1938 = vmul.f32 %v1644, %v1874
        %v1939 = vmul.f32 %v1646, %v1875
        %v1940 = vmul.f32 %v1648, %v1876
        %v1941 = vmul.f32 %v1650, %v1877
        %v1942 = vmul.f32 %v1652, %v1878
        %v1943 = vmul.f32 %v1654, %v1879
        %v1944 = vmul.f32 %v1656, %v1880
        %v1945 = vmul.f32 %v1658, %v1881
        %v1946 = vmul.f32 %v1660, %v1882
        %v1947 = vmul.f32 %v1662, %v1883
        %v1948 = vmul.f32 %v1664, %v1884
        %v1949 = vmul.f32 %v1666, %v1885
        %v1950 = vmul.f32 %v1668, %v1886
        %v1951 = vmul.f32 %v1670, %v1887
        %v1952 = vmul.f32 %v1672, %v1888
        %v1953 = vmul.f32 %v1674, %v1889
        %v1954 = vmul.f32 %v1676, %v1890
        %v1955 = vmul.f32 %v1678, %v1891
        %v1956 = vmul.f32 %v1680, %v1892
        %v1957 = vmul.f32 %v1682, %v1893
        %v1958 = vmul.f32 %v1684, %v1894
        %v1959 = vmul.f32 %v1686, %v1895
        %v1960 = vmul.f32 %v1688, %v1896
        %v1961 = vmul.f32 %v1690, %v1897
        %v1962 = vmul.f32 %v1692, %v1898
        %v1963 = vmul.f32 %v1694, %v1899
        %v1964 = vmul.f32 %v1696, %v1900
        %v1965 = vmul.f32 %v1698, %v1901
        %v1966 = vmul.f32 %v1700, %v1902
        %v1967 = vmul.f32 %v1702, %v1903
        %v1968 = vmul.f32 %v1704, %v1904
        %v1969 = vmul.f32 %v1706, %v1905
        %v1970 = vmul.f32 %v1708, %v1906
        %v1971 = vmul.f32 %v1710, %v1907
        %v1972 = vmul.f32 %v1712, %v1908
        %v1973 = vmul.f32 %v1714, %v1909
        %v1974 = vmul.f32 %v1716, %v1910
        %v1975 = vmul.f32 %v1718, %v1911
        %v1976 = vmul.f32 %v1720, %v1912
        %v1977 = vpack.c.bf16 %v1913, %v1913
        %v1978 = vpack.c.bf16 %v1914, %v1914
        %v1979 = vpack.c.bf16 %v1915, %v1915
        %v1980 = vpack.c.bf16 %v1916, %v1916
        %v1981 = vpack.c.bf16 %v1917, %v1917
        %v1982 = vpack.c.bf16 %v1918, %v1918
        %v1983 = vpack.c.bf16 %v1919, %v1919
        %v1984 = vpack.c.bf16 %v1920, %v1920
        %v1985 = vpack.c.bf16 %v1921, %v1921
        %v1986 = vpack.c.bf16 %v1922, %v1922
        %v1987 = vpack.c.bf16 %v1923, %v1923
        %v1988 = vpack.c.bf16 %v1924, %v1924
        %v1989 = vpack.c.bf16 %v1925, %v1925
        %v1990 = vpack.c.bf16 %v1926, %v1926
        %v1991 = vpack.c.bf16 %v1927, %v1927
        %v1992 = vpack.c.bf16 %v1928, %v1928
        %v1993 = vpack.c.bf16 %v1929, %v1929
        %v1994 = vpack.c.bf16 %v1930, %v1930
        %v1995 = vpack.c.bf16 %v1931, %v1931
        %v1996 = vpack.c.bf16 %v1932, %v1932
        %v1997 = vpack.c.bf16 %v1933, %v1933
        %v1998 = vpack.c.bf16 %v1934, %v1934
        %v1999 = vpack.c.bf16 %v1935, %v1935
        %v2000 = vpack.c.bf16 %v1936, %v1936
        %v2001 = vpack.c.bf16 %v1937, %v1937
        %v2002 = vpack.c.bf16 %v1938, %v1938
        %v2003 = vpack.c.bf16 %v1939, %v1939
        %v2004 = vpack.c.bf16 %v1940, %v1940
        %v2005 = vpack.c.bf16 %v1941, %v1941
        %v2006 = vpack.c.bf16 %v1942, %v1942
        %v2007 = vpack.c.bf16 %v1943, %v1943
        %v2008 = vpack.c.bf16 %v1944, %v1944
        %v2009 = vpack.c.bf16 %v1945, %v1945
        %v2010 = vpack.c.bf16 %v1946, %v1946
        %v2011 = vpack.c.bf16 %v1947, %v1947
        %v2012 = vpack.c.bf16 %v1948, %v1948
        %v2013 = vpack.c.bf16 %v1949, %v1949
        %v2014 = vpack.c.bf16 %v1950, %v1950
        %v2015 = vpack.c.bf16 %v1951, %v1951
        %v2016 = vpack.c.bf16 %v1952, %v1952
        %v2017 = vpack.c.bf16 %v1953, %v1953
        %v2018 = vpack.c.bf16 %v1954, %v1954
        %v2019 = vpack.c.bf16 %v1955, %v1955
        %v2020 = vpack.c.bf16 %v1956, %v1956
        %v2021 = vpack.c.bf16 %v1957, %v1957
        %v2022 = vpack.c.bf16 %v1958, %v1958
        %v2023 = vpack.c.bf16 %v1959, %v1959
        %v2024 = vpack.c.bf16 %v1960, %v1960
        %v2025 = vpack.c.bf16 %v1961, %v1961
        %v2026 = vpack.c.bf16 %v1962, %v1962
        %v2027 = vpack.c.bf16 %v1963, %v1963
        %v2028 = vpack.c.bf16 %v1964, %v1964
        %v2029 = vpack.c.bf16 %v1965, %v1965
        %v2030 = vpack.c.bf16 %v1966, %v1966
        %v2031 = vpack.c.bf16 %v1967, %v1967
        %v2032 = vpack.c.bf16 %v1968, %v1968
        %v2033 = vpack.c.bf16 %v1969, %v1969
        %v2034 = vpack.c.bf16 %v1970, %v1970
        %v2035 = vpack.c.bf16 %v1971, %v1971
        %v2036 = vpack.c.bf16 %v1972, %v1972
        %v2037 = vpack.c.bf16 %v1973, %v1973
        %v2038 = vpack.c.bf16 %v1974, %v1974
        %v2039 = vpack.c.bf16 %v1975, %v1975
        %v2040 = vpack.c.bf16 %v1976, %v1976
        %v2057 = vunpack.c.l.b16 %v1977
        %v2058 = vunpack.c.l.b16 %v1978
        %v2059 = vunpack.c.l.b16 %v1979
        %v2060 = vunpack.c.l.b16 %v1980
        %v2061 = vunpack.c.l.b16 %v1981
        %v2062 = vunpack.c.l.b16 %v1982
        %v2063 = vunpack.c.l.b16 %v1983
        %v2064 = vunpack.c.l.b16 %v1984
        %v2065 = vunpack.c.l.b16 %v1985
        %v2066 = vunpack.c.l.b16 %v1986
        %v2067 = vunpack.c.l.b16 %v1987
        %v2068 = vunpack.c.l.b16 %v1988
        %v2069 = vunpack.c.l.b16 %v1989
        %v2070 = vunpack.c.l.b16 %v1990
        %v2071 = vunpack.c.l.b16 %v1991
        %v2072 = vunpack.c.l.b16 %v1992
        %v2073 = vpack.c.b16 %v2058, %v2057
        %v2074 = vpack.c.b16 %v2060, %v2059
        %v2075 = vpack.c.b16 %v2062, %v2061
        %v2076 = vpack.c.b16 %v2064, %v2063
        %v2077 = vpack.c.b16 %v2066, %v2065
        %v2078 = vpack.c.b16 %v2068, %v2067
        %v2079 = vpack.c.b16 %v2070, %v2069
        %v2080 = vpack.c.b16 %v2072, %v2071
        %2089 = vrot.lane.b32.xlu0 %v724, 64
        %v2090 = vpop.permute.xlu0 %2089
        %2091 = vrot.lane.b32.xlu0 %v725, 64
        %v2092 = vpop.permute.xlu0 %2091
        %2093 = vrot.lane.b32.xlu0 %v726, 64
        %v2094 = vpop.permute.xlu0 %2093
        %2095 = vrot.lane.b32.xlu0 %v727, 64
        %v2096 = vpop.permute.xlu0 %2095
        %2097 = vrot.lane.b32.xlu0 %v728, 64
        %v2098 = vpop.permute.xlu0 %2097
        %2099 = vrot.lane.b32.xlu0 %v729, 64
        %v2100 = vpop.permute.xlu0 %2099
        %2101 = vrot.lane.b32.xlu0 %v730, 64
        %v2102 = vpop.permute.xlu0 %2101
        %2103 = vrot.lane.b32.xlu0 %v731, 64
        %v2104 = vpop.permute.xlu0 %2103
        %2113 = vmatpush.bf16.msra.mxu0 %v2104
        %2114 = vmatpush.bf16.msra.mxu0 %v2102
        %2115 = vmatpush.bf16.msra.mxu0 %v2100
        %2116 = vmatpush.bf16.msra.mxu0 %v2098
        %2117 = vmatpush.bf16.msra.mxu0 %v2096
        %2118 = vmatpush.bf16.msra.mxu0 %v2094
        %2119 = vmatpush.bf16.msra.mxu0 %v2092
        %2120 = vmatpush.bf16.msra.mxu0 %v2090
        %2121 = vmatmul.bf16.gmra.mxu0 %v2073
        %v2122 = vpop.f32.mrf.mxu0
        %v2123 = vadd.f32 0.0, %v2122
        %v2124 = vpop.f32.mrf.mxu0
        %v2125 = vadd.f32 0.0, %v2124
        %2126 = vmatmul.bf16.gmra.mxu0 %v2074
        %v2127 = vpop.f32.mrf.mxu0
        %v2128 = vadd.f32 0.0, %v2127
        %v2129 = vpop.f32.mrf.mxu0
        %v2130 = vadd.f32 0.0, %v2129
        %2131 = vmatmul.bf16.gmra.mxu0 %v2075
        %v2132 = vpop.f32.mrf.mxu0
        %v2133 = vadd.f32 0.0, %v2132
        %v2134 = vpop.f32.mrf.mxu0
        %v2135 = vadd.f32 0.0, %v2134
        %2136 = vmatmul.bf16.gmra.mxu0 %v2076
        %v2137 = vpop.f32.mrf.mxu0
        %v2138 = vadd.f32 0.0, %v2137
        %v2139 = vpop.f32.mrf.mxu0
        %v2140 = vadd.f32 0.0, %v2139
        %2141 = vmatmul.bf16.gmra.mxu0 %v2077
        %v2142 = vpop.f32.mrf.mxu0
        %v2143 = vadd.f32 0.0, %v2142
        %v2144 = vpop.f32.mrf.mxu0
        %v2145 = vadd.f32 0.0, %v2144
        %2146 = vmatmul.bf16.gmra.mxu0 %v2078
        %v2147 = vpop.f32.mrf.mxu0
        %v2148 = vadd.f32 0.0, %v2147
        %v2149 = vpop.f32.mrf.mxu0
        %v2150 = vadd.f32 0.0, %v2149
        %2151 = vmatmul.bf16.gmra.mxu0 %v2079
        %v2152 = vpop.f32.mrf.mxu0
        %v2153 = vadd.f32 0.0, %v2152
        %v2154 = vpop.f32.mrf.mxu0
        %v2155 = vadd.f32 0.0, %v2154
        %2156 = vmatmul.bf16.gmra.mxu0 %v2080
        %v2157 = vpop.f32.mrf.mxu0
        %v2158 = vadd.f32 0.0, %v2157
        %v2159 = vpop.f32.mrf.mxu0
        %v2160 = vadd.f32 0.0, %v2159
        %2161 = vdwg.mxu0
        %v2178 = vunpack.c.l.b16 %v1993
        %v2179 = vunpack.c.l.b16 %v1994
        %v2180 = vunpack.c.l.b16 %v1995
        %v2181 = vunpack.c.l.b16 %v1996
        %v2182 = vunpack.c.l.b16 %v1997
        %v2183 = vunpack.c.l.b16 %v1998
        %v2184 = vunpack.c.l.b16 %v1999
        %v2185 = vunpack.c.l.b16 %v2000
        %v2186 = vunpack.c.l.b16 %v2001
        %v2187 = vunpack.c.l.b16 %v2002
        %v2188 = vunpack.c.l.b16 %v2003
        %v2189 = vunpack.c.l.b16 %v2004
        %v2190 = vunpack.c.l.b16 %v2005
        %v2191 = vunpack.c.l.b16 %v2006
        %v2192 = vunpack.c.l.b16 %v2007
        %v2193 = vunpack.c.l.b16 %v2008
        %v2194 = vpack.c.b16 %v2179, %v2178
        %v2195 = vpack.c.b16 %v2181, %v2180
        %v2196 = vpack.c.b16 %v2183, %v2182
        %v2197 = vpack.c.b16 %v2185, %v2184
        %v2198 = vpack.c.b16 %v2187, %v2186
        %v2199 = vpack.c.b16 %v2189, %v2188
        %v2200 = vpack.c.b16 %v2191, %v2190
        %v2201 = vpack.c.b16 %v2193, %v2192
        %2210 = vrot.lane.b32.xlu0 %v862, 64
        %v2211 = vpop.permute.xlu0 %2210
        %2212 = vrot.lane.b32.xlu0 %v863, 64
        %v2213 = vpop.permute.xlu0 %2212
        %2214 = vrot.lane.b32.xlu0 %v864, 64
        %v2215 = vpop.permute.xlu0 %2214
        %2216 = vrot.lane.b32.xlu0 %v865, 64
        %v2217 = vpop.permute.xlu0 %2216
        %2218 = vrot.lane.b32.xlu0 %v866, 64
        %v2219 = vpop.permute.xlu0 %2218
        %2220 = vrot.lane.b32.xlu0 %v867, 64
        %v2221 = vpop.permute.xlu0 %2220
        %2222 = vrot.lane.b32.xlu0 %v868, 64
        %v2223 = vpop.permute.xlu0 %2222
        %2224 = vrot.lane.b32.xlu0 %v869, 64
        %v2225 = vpop.permute.xlu0 %2224
        %2234 = vmatpush.bf16.msra.mxu0 %v2225
        %2235 = vmatpush.bf16.msra.mxu0 %v2223
        %2236 = vmatpush.bf16.msra.mxu0 %v2221
        %2237 = vmatpush.bf16.msra.mxu0 %v2219
        %2238 = vmatpush.bf16.msra.mxu0 %v2217
        %2239 = vmatpush.bf16.msra.mxu0 %v2215
        %2240 = vmatpush.bf16.msra.mxu0 %v2213
        %2241 = vmatpush.bf16.msra.mxu0 %v2211
        %2242 = vmatmul.bf16.gmra.mxu0 %v2194
        %v2243 = vpop.f32.mrf.mxu0
        %v2244 = vadd.f32 0.0, %v2243
        %v2245 = vpop.f32.mrf.mxu0
        %v2246 = vadd.f32 0.0, %v2245
        %2247 = vmatmul.bf16.gmra.mxu0 %v2195
        %v2248 = vpop.f32.mrf.mxu0
        %v2249 = vadd.f32 0.0, %v2248
        %v2250 = vpop.f32.mrf.mxu0
        %v2251 = vadd.f32 0.0, %v2250
        %2252 = vmatmul.bf16.gmra.mxu0 %v2196
        %v2253 = vpop.f32.mrf.mxu0
        %v2254 = vadd.f32 0.0, %v2253
        %v2255 = vpop.f32.mrf.mxu0
        %v2256 = vadd.f32 0.0, %v2255
        %2257 = vmatmul.bf16.gmra.mxu0 %v2197
        %v2258 = vpop.f32.mrf.mxu0
        %v2259 = vadd.f32 0.0, %v2258
        %v2260 = vpop.f32.mrf.mxu0
        %v2261 = vadd.f32 0.0, %v2260
        %2262 = vmatmul.bf16.gmra.mxu0 %v2198
        %v2263 = vpop.f32.mrf.mxu0
        %v2264 = vadd.f32 0.0, %v2263
        %v2265 = vpop.f32.mrf.mxu0
        %v2266 = vadd.f32 0.0, %v2265
        %2267 = vmatmul.bf16.gmra.mxu0 %v2199
        %v2268 = vpop.f32.mrf.mxu0
        %v2269 = vadd.f32 0.0, %v2268
        %v2270 = vpop.f32.mrf.mxu0
        %v2271 = vadd.f32 0.0, %v2270
        %2272 = vmatmul.bf16.gmra.mxu0 %v2200
        %v2273 = vpop.f32.mrf.mxu0
        %v2274 = vadd.f32 0.0, %v2273
        %v2275 = vpop.f32.mrf.mxu0
        %v2276 = vadd.f32 0.0, %v2275
        %2277 = vmatmul.bf16.gmra.mxu0 %v2201
        %v2278 = vpop.f32.mrf.mxu0
        %v2279 = vadd.f32 0.0, %v2278
        %v2280 = vpop.f32.mrf.mxu0
        %v2281 = vadd.f32 0.0, %v2280
        %2282 = vdwg.mxu0
        %v2299 = vunpack.c.l.b16 %v2009
        %v2300 = vunpack.c.l.b16 %v2010
        %v2301 = vunpack.c.l.b16 %v2011
        %v2302 = vunpack.c.l.b16 %v2012
        %v2303 = vunpack.c.l.b16 %v2013
        %v2304 = vunpack.c.l.b16 %v2014
        %v2305 = vunpack.c.l.b16 %v2015
        %v2306 = vunpack.c.l.b16 %v2016
        %v2307 = vunpack.c.l.b16 %v2017
        %v2308 = vunpack.c.l.b16 %v2018
        %v2309 = vunpack.c.l.b16 %v2019
        %v2310 = vunpack.c.l.b16 %v2020
        %v2311 = vunpack.c.l.b16 %v2021
        %v2312 = vunpack.c.l.b16 %v2022
        %v2313 = vunpack.c.l.b16 %v2023
        %v2314 = vunpack.c.l.b16 %v2024
        %v2315 = vpack.c.b16 %v2300, %v2299
        %v2316 = vpack.c.b16 %v2302, %v2301
        %v2317 = vpack.c.b16 %v2304, %v2303
        %v2318 = vpack.c.b16 %v2306, %v2305
        %v2319 = vpack.c.b16 %v2308, %v2307
        %v2320 = vpack.c.b16 %v2310, %v2309
        %v2321 = vpack.c.b16 %v2312, %v2311
        %v2322 = vpack.c.b16 %v2314, %v2313
        %2331 = vrot.lane.b32.xlu0 %v999, 64
        %v2332 = vpop.permute.xlu0 %2331
        %2333 = vrot.lane.b32.xlu0 %v1000, 64
        %v2334 = vpop.permute.xlu0 %2333
        %2335 = vrot.lane.b32.xlu0 %v1001, 64
        %v2336 = vpop.permute.xlu0 %2335
        %2337 = vrot.lane.b32.xlu0 %v1002, 64
        %v2338 = vpop.permute.xlu0 %2337
        %2339 = vrot.lane.b32.xlu0 %v1003, 64
        %v2340 = vpop.permute.xlu0 %2339
        %2341 = vrot.lane.b32.xlu0 %v1004, 64
        %v2342 = vpop.permute.xlu0 %2341
        %2343 = vrot.lane.b32.xlu0 %v1005, 64
        %v2344 = vpop.permute.xlu0 %2343
        %2345 = vrot.lane.b32.xlu0 %v1006, 64
        %v2346 = vpop.permute.xlu0 %2345
        %2355 = vmatpush.bf16.msra.mxu0 %v2346
        %2356 = vmatpush.bf16.msra.mxu0 %v2344
        %2357 = vmatpush.bf16.msra.mxu0 %v2342
        %2358 = vmatpush.bf16.msra.mxu0 %v2340
        %2359 = vmatpush.bf16.msra.mxu0 %v2338
        %2360 = vmatpush.bf16.msra.mxu0 %v2336
        %2361 = vmatpush.bf16.msra.mxu0 %v2334
        %2362 = vmatpush.bf16.msra.mxu0 %v2332
        %2363 = vmatmul.bf16.gmra.mxu0 %v2315
        %v2364 = vpop.f32.mrf.mxu0
        %v2365 = vadd.f32 0.0, %v2364
        %v2366 = vpop.f32.mrf.mxu0
        %v2367 = vadd.f32 0.0, %v2366
        %2368 = vmatmul.bf16.gmra.mxu0 %v2316
        %v2369 = vpop.f32.mrf.mxu0
        %v2370 = vadd.f32 0.0, %v2369
        %v2371 = vpop.f32.mrf.mxu0
        %v2372 = vadd.f32 0.0, %v2371
        %2373 = vmatmul.bf16.gmra.mxu0 %v2317
        %v2374 = vpop.f32.mrf.mxu0
        %v2375 = vadd.f32 0.0, %v2374
        %v2376 = vpop.f32.mrf.mxu0
        %v2377 = vadd.f32 0.0, %v2376
        %2378 = vmatmul.bf16.gmra.mxu0 %v2318
        %v2379 = vpop.f32.mrf.mxu0
        %v2380 = vadd.f32 0.0, %v2379
        %v2381 = vpop.f32.mrf.mxu0
        %v2382 = vadd.f32 0.0, %v2381
        %2383 = vmatmul.bf16.gmra.mxu0 %v2319
        %v2384 = vpop.f32.mrf.mxu0
        %v2385 = vadd.f32 0.0, %v2384
        %v2386 = vpop.f32.mrf.mxu0
        %v2387 = vadd.f32 0.0, %v2386
        %2388 = vmatmul.bf16.gmra.mxu0 %v2320
        %v2389 = vpop.f32.mrf.mxu0
        %v2390 = vadd.f32 0.0, %v2389
        %v2391 = vpop.f32.mrf.mxu0
        %v2392 = vadd.f32 0.0, %v2391
        %2393 = vmatmul.bf16.gmra.mxu0 %v2321
        %v2394 = vpop.f32.mrf.mxu0
        %v2395 = vadd.f32 0.0, %v2394
        %v2396 = vpop.f32.mrf.mxu0
        %v2397 = vadd.f32 0.0, %v2396
        %2398 = vmatmul.bf16.gmra.mxu0 %v2322
        %v2399 = vpop.f32.mrf.mxu0
        %v2400 = vadd.f32 0.0, %v2399
        %v2401 = vpop.f32.mrf.mxu0
        %v2402 = vadd.f32 0.0, %v2401
        %2403 = vdwg.mxu0
        %v2420 = vunpack.c.l.b16 %v2025
        %v2421 = vunpack.c.l.b16 %v2026
        %v2422 = vunpack.c.l.b16 %v2027
        %v2423 = vunpack.c.l.b16 %v2028
        %v2424 = vunpack.c.l.b16 %v2029
        %v2425 = vunpack.c.l.b16 %v2030
        %v2426 = vunpack.c.l.b16 %v2031
        %v2427 = vunpack.c.l.b16 %v2032
        %v2428 = vunpack.c.l.b16 %v2033
        %v2429 = vunpack.c.l.b16 %v2034
        %v2430 = vunpack.c.l.b16 %v2035
        %v2431 = vunpack.c.l.b16 %v2036
        %v2432 = vunpack.c.l.b16 %v2037
        %v2433 = vunpack.c.l.b16 %v2038
        %v2434 = vunpack.c.l.b16 %v2039
        %v2435 = vunpack.c.l.b16 %v2040
        %v2436 = vpack.c.b16 %v2421, %v2420
        %v2437 = vpack.c.b16 %v2423, %v2422
        %v2438 = vpack.c.b16 %v2425, %v2424
        %v2439 = vpack.c.b16 %v2427, %v2426
        %v2440 = vpack.c.b16 %v2429, %v2428
        %v2441 = vpack.c.b16 %v2431, %v2430
        %v2442 = vpack.c.b16 %v2433, %v2432
        %v2443 = vpack.c.b16 %v2435, %v2434
        %2452 = vrot.lane.b32.xlu0 %v1136, 64
        %v2453 = vpop.permute.xlu0 %2452
        %2454 = vrot.lane.b32.xlu0 %v1137, 64
        %v2455 = vpop.permute.xlu0 %2454
        %2456 = vrot.lane.b32.xlu0 %v1138, 64
        %v2457 = vpop.permute.xlu0 %2456
        %2458 = vrot.lane.b32.xlu0 %v1139, 64
        %v2459 = vpop.permute.xlu0 %2458
        %2460 = vrot.lane.b32.xlu0 %v1140, 64
        %v2461 = vpop.permute.xlu0 %2460
        %2462 = vrot.lane.b32.xlu0 %v1141, 64
        %v2463 = vpop.permute.xlu0 %2462
        %2464 = vrot.lane.b32.xlu0 %v1142, 64
        %v2465 = vpop.permute.xlu0 %2464
        %2466 = vrot.lane.b32.xlu0 %v1143, 64
        %v2467 = vpop.permute.xlu0 %2466
        %2476 = vmatpush.bf16.msra.mxu0 %v2467
        %2477 = vmatpush.bf16.msra.mxu0 %v2465
        %2478 = vmatpush.bf16.msra.mxu0 %v2463
        %2479 = vmatpush.bf16.msra.mxu0 %v2461
        %2480 = vmatpush.bf16.msra.mxu0 %v2459
        %2481 = vmatpush.bf16.msra.mxu0 %v2457
        %2482 = vmatpush.bf16.msra.mxu0 %v2455
        %2483 = vmatpush.bf16.msra.mxu0 %v2453
        %2484 = vmatmul.bf16.gmra.mxu0 %v2436
        %v2485 = vpop.f32.mrf.mxu0
        %v2486 = vadd.f32 0.0, %v2485
        %v2487 = vpop.f32.mrf.mxu0
        %v2488 = vadd.f32 0.0, %v2487
        %2489 = vmatmul.bf16.gmra.mxu0 %v2437
        %v2490 = vpop.f32.mrf.mxu0
        %v2491 = vadd.f32 0.0, %v2490
        %v2492 = vpop.f32.mrf.mxu0
        %v2493 = vadd.f32 0.0, %v2492
        %2494 = vmatmul.bf16.gmra.mxu0 %v2438
        %v2495 = vpop.f32.mrf.mxu0
        %v2496 = vadd.f32 0.0, %v2495
        %v2497 = vpop.f32.mrf.mxu0
        %v2498 = vadd.f32 0.0, %v2497
        %2499 = vmatmul.bf16.gmra.mxu0 %v2439
        %v2500 = vpop.f32.mrf.mxu0
        %v2501 = vadd.f32 0.0, %v2500
        %v2502 = vpop.f32.mrf.mxu0
        %v2503 = vadd.f32 0.0, %v2502
        %2504 = vmatmul.bf16.gmra.mxu0 %v2440
        %v2505 = vpop.f32.mrf.mxu0
        %v2506 = vadd.f32 0.0, %v2505
        %v2507 = vpop.f32.mrf.mxu0
        %v2508 = vadd.f32 0.0, %v2507
        %2509 = vmatmul.bf16.gmra.mxu0 %v2441
        %v2510 = vpop.f32.mrf.mxu0
        %v2511 = vadd.f32 0.0, %v2510
        %v2512 = vpop.f32.mrf.mxu0
        %v2513 = vadd.f32 0.0, %v2512
        %2514 = vmatmul.bf16.gmra.mxu0 %v2442
        %v2515 = vpop.f32.mrf.mxu0
        %v2516 = vadd.f32 0.0, %v2515
        %v2517 = vpop.f32.mrf.mxu0
        %v2518 = vadd.f32 0.0, %v2517
        %2519 = vmatmul.bf16.gmra.mxu0 %v2443
        %v2520 = vpop.f32.mrf.mxu0
        %v2521 = vadd.f32 0.0, %v2520
        %v2522 = vpop.f32.mrf.mxu0
        %v2523 = vadd.f32 0.0, %v2522
        %2524 = vdwg.mxu0
        %2541 = vrot.lane.b32.xlu0 %v2244, 8
        %v2542 = vpop.permute.xlu0 %2541
        %2543 = vrot.lane.b32.xlu0 %v2246, 8
        %v2544 = vpop.permute.xlu0 %2543
        %2545 = vrot.lane.b32.xlu0 %v2249, 8
        %v2546 = vpop.permute.xlu0 %2545
        %2547 = vrot.lane.b32.xlu0 %v2251, 8
        %v2548 = vpop.permute.xlu0 %2547
        %2549 = vrot.lane.b32.xlu0 %v2254, 8
        %v2550 = vpop.permute.xlu0 %2549
        %2551 = vrot.lane.b32.xlu0 %v2256, 8
        %v2552 = vpop.permute.xlu0 %2551
        %2553 = vrot.lane.b32.xlu0 %v2259, 8
        %v2554 = vpop.permute.xlu0 %2553
        %2555 = vrot.lane.b32.xlu0 %v2261, 8
        %v2556 = vpop.permute.xlu0 %2555
        %2557 = vrot.lane.b32.xlu0 %v2264, 8
        %v2558 = vpop.permute.xlu0 %2557
        %2559 = vrot.lane.b32.xlu0 %v2266, 8
        %v2560 = vpop.permute.xlu0 %2559
        %2561 = vrot.lane.b32.xlu0 %v2269, 8
        %v2562 = vpop.permute.xlu0 %2561
        %2563 = vrot.lane.b32.xlu0 %v2271, 8
        %v2564 = vpop.permute.xlu0 %2563
        %2565 = vrot.lane.b32.xlu0 %v2274, 8
        %v2566 = vpop.permute.xlu0 %2565
        %2567 = vrot.lane.b32.xlu0 %v2276, 8
        %v2568 = vpop.permute.xlu0 %2567
        %2569 = vrot.lane.b32.xlu0 %v2279, 8
        %v2570 = vpop.permute.xlu0 %2569
        %2571 = vrot.lane.b32.xlu0 %v2281, 8
        %v2572 = vpop.permute.xlu0 %2571
        %2605 = vrot.lane.b32.xlu0 %v2365, 16
        %v2606 = vpop.permute.xlu0 %2605
        %2607 = vrot.lane.b32.xlu0 %v2367, 16
        %v2608 = vpop.permute.xlu0 %2607
        %2609 = vrot.lane.b32.xlu0 %v2370, 16
        %v2610 = vpop.permute.xlu0 %2609
        %2611 = vrot.lane.b32.xlu0 %v2372, 16
        %v2612 = vpop.permute.xlu0 %2611
        %2613 = vrot.lane.b32.xlu0 %v2375, 16
        %v2614 = vpop.permute.xlu0 %2613
        %2615 = vrot.lane.b32.xlu0 %v2377, 16
        %v2616 = vpop.permute.xlu0 %2615
        %2617 = vrot.lane.b32.xlu0 %v2380, 16
        %v2618 = vpop.permute.xlu0 %2617
        %2619 = vrot.lane.b32.xlu0 %v2382, 16
        %v2620 = vpop.permute.xlu0 %2619
        %2621 = vrot.lane.b32.xlu0 %v2385, 16
        %v2622 = vpop.permute.xlu0 %2621
        %2623 = vrot.lane.b32.xlu0 %v2387, 16
        %v2624 = vpop.permute.xlu0 %2623
        %2625 = vrot.lane.b32.xlu0 %v2390, 16
        %v2626 = vpop.permute.xlu0 %2625
        %2627 = vrot.lane.b32.xlu0 %v2392, 16
        %v2628 = vpop.permute.xlu0 %2627
        %2629 = vrot.lane.b32.xlu0 %v2395, 16
        %v2630 = vpop.permute.xlu0 %2629
        %2631 = vrot.lane.b32.xlu0 %v2397, 16
        %v2632 = vpop.permute.xlu0 %2631
        %2633 = vrot.lane.b32.xlu0 %v2400, 16
        %v2634 = vpop.permute.xlu0 %2633
        %2635 = vrot.lane.b32.xlu0 %v2402, 16
        %v2636 = vpop.permute.xlu0 %2635
        %2669 = vrot.lane.b32.xlu0 %v2486, 24
        %v2670 = vpop.permute.xlu0 %2669
        %2671 = vrot.lane.b32.xlu0 %v2488, 24
        %v2672 = vpop.permute.xlu0 %2671
        %2673 = vrot.lane.b32.xlu0 %v2491, 24
        %v2674 = vpop.permute.xlu0 %2673
        %2675 = vrot.lane.b32.xlu0 %v2493, 24
        %v2676 = vpop.permute.xlu0 %2675
        %2677 = vrot.lane.b32.xlu0 %v2496, 24
        %v2678 = vpop.permute.xlu0 %2677
        %2679 = vrot.lane.b32.xlu0 %v2498, 24
        %v2680 = vpop.permute.xlu0 %2679
        %2681 = vrot.lane.b32.xlu0 %v2501, 24
        %v2682 = vpop.permute.xlu0 %2681
        %2683 = vrot.lane.b32.xlu0 %v2503, 24
        %v2684 = vpop.permute.xlu0 %2683
        %2685 = vrot.lane.b32.xlu0 %v2506, 24
        %v2686 = vpop.permute.xlu0 %2685
        %2687 = vrot.lane.b32.xlu0 %v2508, 24
        %v2688 = vpop.permute.xlu0 %2687
        %2689 = vrot.lane.b32.xlu0 %v2511, 24
        %v2690 = vpop.permute.xlu0 %2689
        %2691 = vrot.lane.b32.xlu0 %v2513, 24
        %v2692 = vpop.permute.xlu0 %2691
        %2693 = vrot.lane.b32.xlu0 %v2516, 24
        %v2694 = vpop.permute.xlu0 %2693
        %2695 = vrot.lane.b32.xlu0 %v2518, 24
        %v2696 = vpop.permute.xlu0 %2695
        %2697 = vrot.lane.b32.xlu0 %v2521, 24
        %v2698 = vpop.permute.xlu0 %2697
        %2699 = vrot.lane.b32.xlu0 %v2523, 24
        %v2700 = vpop.permute.xlu0 %2699
        %v2717 = vsel %vm748, %v2123, %v2542
        %v2718 = vsel %vm748, %v2125, %v2544
        %v2719 = vsel %vm748, %v2128, %v2546
        %v2720 = vsel %vm748, %v2130, %v2548
        %v2721 = vsel %vm748, %v2133, %v2550
        %v2722 = vsel %vm748, %v2135, %v2552
        %v2723 = vsel %vm748, %v2138, %v2554
        %v2724 = vsel %vm748, %v2140, %v2556
        %v2725 = vsel %vm748, %v2143, %v2558
        %v2726 = vsel %vm748, %v2145, %v2560
        %v2727 = vsel %vm748, %v2148, %v2562
        %v2728 = vsel %vm748, %v2150, %v2564
        %v2729 = vsel %vm748, %v2153, %v2566
        %v2730 = vsel %vm748, %v2155, %v2568
        %v2731 = vsel %vm748, %v2158, %v2570
        %v2732 = vsel %vm748, %v2160, %v2572
        %vm2733 = vcmask 130048
        %v2734 = vsel %vm2733, %v2717, %v2606
        %v2735 = vsel %vm2733, %v2718, %v2608
        %v2736 = vsel %vm2733, %v2719, %v2610
        %v2737 = vsel %vm2733, %v2720, %v2612
        %v2738 = vsel %vm2733, %v2721, %v2614
        %v2739 = vsel %vm2733, %v2722, %v2616
        %v2740 = vsel %vm2733, %v2723, %v2618
        %v2741 = vsel %vm2733, %v2724, %v2620
        %v2742 = vsel %vm2733, %v2725, %v2622
        %v2743 = vsel %vm2733, %v2726, %v2624
        %v2744 = vsel %vm2733, %v2727, %v2626
        %v2745 = vsel %vm2733, %v2728, %v2628
        %v2746 = vsel %vm2733, %v2729, %v2630
        %v2747 = vsel %vm2733, %v2730, %v2632
        %v2748 = vsel %vm2733, %v2731, %v2634
        %v2749 = vsel %vm2733, %v2732, %v2636
        %vm2750 = vcmask 195584
        %v2751 = vsel %vm2750, %v2734, %v2670
        %v2752 = vsel %vm2750, %v2735, %v2672
        %v2753 = vsel %vm2750, %v2736, %v2674
        %v2754 = vsel %vm2750, %v2737, %v2676
        %v2755 = vsel %vm2750, %v2738, %v2678
        %v2756 = vsel %vm2750, %v2739, %v2680
        %v2757 = vsel %vm2750, %v2740, %v2682
        %v2758 = vsel %vm2750, %v2741, %v2684
        %v2759 = vsel %vm2750, %v2742, %v2686
        %v2760 = vsel %vm2750, %v2743, %v2688
        %v2761 = vsel %vm2750, %v2744, %v2690
        %v2762 = vsel %vm2750, %v2745, %v2692
        %v2763 = vsel %vm2750, %v2746, %v2694
        %v2764 = vsel %vm2750, %v2747, %v2696
        %v2765 = vsel %vm2750, %v2748, %v2698
        %v2766 = vsel %vm2750, %v2749, %v2700
        %v2767 = vpack.c.bf16 %v2752, %v2751
        %v2768 = vpack.c.bf16 %v2754, %v2753
        %v2769 = vpack.c.bf16 %v2756, %v2755
        %v2770 = vpack.c.bf16 %v2758, %v2757
        %v2771 = vpack.c.bf16 %v2760, %v2759
        %v2772 = vpack.c.bf16 %v2762, %v2761
        %v2773 = vpack.c.bf16 %v2764, %v2763
        %v2774 = vpack.c.bf16 %v2766, %v2765
        %v2775 = vld [vmem:[%s6] sm:$0xf]
        %v2776 = vld [vmem:[%s6 + $0x4] sm:$0xf]
        %v2777 = vld [vmem:[%s6 + $0x8] sm:$0xf]
        %v2778 = vld [vmem:[%s6 + $0xc] sm:$0xf]
        %v2779 = vld [vmem:[%s7] sm:$0x1]
        %v2781 = vperm.slane %v2779, 0
        %v2787 = vunpack.c.l.b16 %v2775
        %v2788 = vunpack.c.l.b16 %v2776
        %v2789 = vunpack.c.l.b16 %v2777
        %v2790 = vunpack.c.l.b16 %v2778
        %v2791 = vpack.c.b16 %v2788, %v2787
        %v2792 = vpack.c.b16 %v2790, %v2789
        %vm2795 = vcmask 261120
        %v2797 = vsel %vm2795, %v2767, 0
        %v2800 = vsel %vm2795, %v2768, 0
        %v2803 = vsel %vm2795, %v2769, 0
        %v2806 = vsel %vm2795, %v2770, 0
        %v2809 = vsel %vm2795, %v2771, 0
        %v2812 = vsel %vm2795, %v2772, 0
        %v2815 = vsel %vm2795, %v2773, 0
        %v2818 = vsel %vm2795, %v2774, 0
        %2820 = vmatpush.bf16.msra.mxu0 0
        %2821 = vmatpush.bf16.msra.mxu0 0
        %2822 = vmatpush.bf16.msra.mxu0 0
        %2823 = vmatpush.bf16.msra.mxu0 0
        %2824 = vmatpush.bf16.msra.mxu0 0
        %2825 = vmatpush.bf16.msra.mxu0 0
        %2826 = vmatpush.bf16.msra.mxu0 %v2792
        %2827 = vmatpush.bf16.msra.mxu0 %v2791
        %2828 = vmatmul.bf16.gmra.mxu0 %v2797
        %v2829 = vpop.f32.mrf.mxu0
        %v2830 = vadd.f32 %v2781, %v2829
        %v2831 = vpop.f32.mrf.mxu0
        %v2832 = vadd.f32 %v2781, %v2831
        %2833 = vmatmul.bf16.gmra.mxu0 %v2800
        %v2834 = vpop.f32.mrf.mxu0
        %v2835 = vadd.f32 %v2781, %v2834
        %v2836 = vpop.f32.mrf.mxu0
        %v2837 = vadd.f32 %v2781, %v2836
        %2838 = vmatmul.bf16.gmra.mxu0 %v2803
        %v2839 = vpop.f32.mrf.mxu0
        %v2840 = vadd.f32 %v2781, %v2839
        %v2841 = vpop.f32.mrf.mxu0
        %v2842 = vadd.f32 %v2781, %v2841
        %2843 = vmatmul.bf16.gmra.mxu0 %v2806
        %v2844 = vpop.f32.mrf.mxu0
        %v2845 = vadd.f32 %v2781, %v2844
        %v2846 = vpop.f32.mrf.mxu0
        %v2847 = vadd.f32 %v2781, %v2846
        %2848 = vmatmul.bf16.gmra.mxu0 %v2809
        %v2849 = vpop.f32.mrf.mxu0
        %v2850 = vadd.f32 %v2781, %v2849
        %v2851 = vpop.f32.mrf.mxu0
        %v2852 = vadd.f32 %v2781, %v2851
        %2853 = vmatmul.bf16.gmra.mxu0 %v2812
        %v2854 = vpop.f32.mrf.mxu0
        %v2855 = vadd.f32 %v2781, %v2854
        %v2856 = vpop.f32.mrf.mxu0
        %v2857 = vadd.f32 %v2781, %v2856
        %2858 = vmatmul.bf16.gmra.mxu0 %v2815
        %v2859 = vpop.f32.mrf.mxu0
        %v2860 = vadd.f32 %v2781, %v2859
        %v2861 = vpop.f32.mrf.mxu0
        %v2862 = vadd.f32 %v2781, %v2861
        %2863 = vmatmul.bf16.gmra.mxu0 %v2818
        %v2864 = vpop.f32.mrf.mxu0
        %v2865 = vadd.f32 %v2781, %v2864
        %v2866 = vpop.f32.mrf.mxu0
        %v2867 = vadd.f32 %v2781, %v2866
        %2868 = vdwg.mxu0
        %v2869 = vadd.f32 %v484, %v2830
        %v2870 = vadd.f32 %v486, %v2832
        %v2871 = vadd.f32 %v489, %v2835
        %v2872 = vadd.f32 %v491, %v2837
        %v2873 = vadd.f32 %v494, %v2840
        %v2874 = vadd.f32 %v496, %v2842
        %v2875 = vadd.f32 %v499, %v2845
        %v2876 = vadd.f32 %v501, %v2847
        %v2877 = vadd.f32 %v504, %v2850
        %v2878 = vadd.f32 %v506, %v2852
        %v2879 = vadd.f32 %v509, %v2855
        %v2880 = vadd.f32 %v511, %v2857
        %v2881 = vadd.f32 %v514, %v2860
        %v2882 = vadd.f32 %v516, %v2862
        %v2883 = vadd.f32 %v519, %v2865
        %v2884 = vadd.f32 %v521, %v2867
        %v2885 = vpack.c.bf16 %v2870, %v2869
        %v2886 = vpack.c.bf16 %v2872, %v2871
        %v2887 = vpack.c.bf16 %v2874, %v2873
        %v2888 = vpack.c.bf16 %v2876, %v2875
        %v2889 = vpack.c.bf16 %v2878, %v2877
        %v2890 = vpack.c.bf16 %v2880, %v2879
        %v2891 = vpack.c.bf16 %v2882, %v2881
        %v2892 = vpack.c.bf16 %v2884, %v2883
        %v2893 = vld [vmem:[%s8] sm:$0xf]
        %v2894 = vld [vmem:[%s8 + $0x4] sm:$0xf]
        %v2895 = vld [vmem:[%s8 + $0x8] sm:$0xf]
        %v2896 = vld [vmem:[%s8 + $0xc] sm:$0xf]
        %v2897 = vld [vmem:[%s9] sm:$0x1]
        %v2899 = vperm.slane %v2897, 0
        %v2905 = vunpack.c.l.b16 %v2893
        %v2906 = vunpack.c.l.b16 %v2894
        %v2907 = vunpack.c.l.b16 %v2895
        %v2908 = vunpack.c.l.b16 %v2896
        %v2909 = vpack.c.b16 %v2906, %v2905
        %v2910 = vpack.c.b16 %v2908, %v2907
        %v2914 = vsel %vm2795, %v2885, 0
        %v2917 = vsel %vm2795, %v2886, 0
        %v2920 = vsel %vm2795, %v2887, 0
        %v2923 = vsel %vm2795, %v2888, 0
        %v2926 = vsel %vm2795, %v2889, 0
        %v2929 = vsel %vm2795, %v2890, 0
        %v2932 = vsel %vm2795, %v2891, 0
        %v2935 = vsel %vm2795, %v2892, 0
        %2937 = vmatpush.bf16.msra.mxu0 0
        %2938 = vmatpush.bf16.msra.mxu0 0
        %2939 = vmatpush.bf16.msra.mxu0 0
        %2940 = vmatpush.bf16.msra.mxu0 0
        %2941 = vmatpush.bf16.msra.mxu0 0
        %2942 = vmatpush.bf16.msra.mxu0 0
        %2943 = vmatpush.bf16.msra.mxu0 %v2910
        %2944 = vmatpush.bf16.msra.mxu0 %v2909
        %2945 = vmatmul.bf16.gmra.mxu0 %v2914
        %v2946 = vpop.f32.mrf.mxu0
        %v2947 = vadd.f32 %v2899, %v2946
        %v2948 = vpop.f32.mrf.mxu0
        %v2949 = vadd.f32 %v2899, %v2948
        %2950 = vmatmul.bf16.gmra.mxu0 %v2917
        %v2951 = vpop.f32.mrf.mxu0
        %v2952 = vadd.f32 %v2899, %v2951
        %v2953 = vpop.f32.mrf.mxu0
        %v2954 = vadd.f32 %v2899, %v2953
        %2955 = vmatmul.bf16.gmra.mxu0 %v2920
        %v2956 = vpop.f32.mrf.mxu0
        %v2957 = vadd.f32 %v2899, %v2956
        %v2958 = vpop.f32.mrf.mxu0
        %v2959 = vadd.f32 %v2899, %v2958
        %2960 = vmatmul.bf16.gmra.mxu0 %v2923
        %v2961 = vpop.f32.mrf.mxu0
        %v2962 = vadd.f32 %v2899, %v2961
        %v2963 = vpop.f32.mrf.mxu0
        %v2964 = vadd.f32 %v2899, %v2963
        %2965 = vmatmul.bf16.gmra.mxu0 %v2926
        %v2966 = vpop.f32.mrf.mxu0
        %v2967 = vadd.f32 %v2899, %v2966
        %v2968 = vpop.f32.mrf.mxu0
        %v2969 = vadd.f32 %v2899, %v2968
        %2970 = vmatmul.bf16.gmra.mxu0 %v2929
        %v2971 = vpop.f32.mrf.mxu0
        %v2972 = vadd.f32 %v2899, %v2971
        %v2973 = vpop.f32.mrf.mxu0
        %v2974 = vadd.f32 %v2899, %v2973
        %2975 = vmatmul.bf16.gmra.mxu0 %v2932
        %v2976 = vpop.f32.mrf.mxu0
        %v2977 = vadd.f32 %v2899, %v2976
        %v2978 = vpop.f32.mrf.mxu0
        %v2979 = vadd.f32 %v2899, %v2978
        %2980 = vmatmul.bf16.gmra.mxu0 %v2935
        %v2981 = vpop.f32.mrf.mxu0
        %v2982 = vadd.f32 %v2899, %v2981
        %v2983 = vpop.f32.mrf.mxu0
        %v2984 = vadd.f32 %v2899, %v2983
        %2985 = vdwg.mxu0
        %v2986 = vmax.f32 %v2947, 0.0
        %v2987 = vmax.f32 %v2949, 0.0
        %v2988 = vmax.f32 %v2952, 0.0
        %v2989 = vmax.f32 %v2954, 0.0
        %v2990 = vmax.f32 %v2957, 0.0
        %v2991 = vmax.f32 %v2959, 0.0
        %v2992 = vmax.f32 %v2962, 0.0
        %v2993 = vmax.f32 %v2964, 0.0
        %v2994 = vmax.f32 %v2967, 0.0
        %v2995 = vmax.f32 %v2969, 0.0
        %v2996 = vmax.f32 %v2972, 0.0
        %v2997 = vmax.f32 %v2974, 0.0
        %v2998 = vmax.f32 %v2977, 0.0
        %v2999 = vmax.f32 %v2979, 0.0
        %v3000 = vmax.f32 %v2982, 0.0
        %v3001 = vmax.f32 %v2984, 0.0
        %v3002 = vpack.c.bf16 %v2987, %v2986
        %v3003 = vpack.c.bf16 %v2989, %v2988
        %v3004 = vpack.c.bf16 %v2991, %v2990
        %v3005 = vpack.c.bf16 %v2993, %v2992
        %v3006 = vpack.c.bf16 %v2995, %v2994
        %v3007 = vpack.c.bf16 %v2997, %v2996
        %v3008 = vpack.c.bf16 %v2999, %v2998
        %v3009 = vpack.c.bf16 %v3001, %v3000
        %v3010 = vld [vmem:[%s10] sm:$0xf]
        %v3011 = vld [vmem:[%s10 + $0x4] sm:$0xf]
        %v3012 = vld [vmem:[%s10 + $0x8] sm:$0xf]
        %v3013 = vld [vmem:[%s10 + $0xc] sm:$0xf]
        %v3014 = vld [vmem:[%s10 + $0x10] sm:$0xf]
        %v3015 = vld [vmem:[%s10 + $0x14] sm:$0xf]
        %v3016 = vld [vmem:[%s10 + $0x18] sm:$0xf]
        %v3017 = vld [vmem:[%s10 + $0x1c] sm:$0xf]
        %v3018 = vld [vmem:[%s11] sm:$0x1]
        %v3020 = vperm.slane %v3018, 0
        %v3030 = vunpack.c.l.b16 %v3010
        %v3031 = vunpack.c.l.b16 %v3011
        %v3032 = vunpack.c.l.b16 %v3012
        %v3033 = vunpack.c.l.b16 %v3013
        %v3034 = vunpack.c.l.b16 %v3014
        %v3035 = vunpack.c.l.b16 %v3015
        %v3036 = vunpack.c.l.b16 %v3016
        %v3037 = vunpack.c.l.b16 %v3017
        %v3038 = vpack.c.b16 %v3031, %v3030
        %v3039 = vpack.c.b16 %v3033, %v3032
        %v3040 = vpack.c.b16 %v3035, %v3034
        %v3041 = vpack.c.b16 %v3037, %v3036
        %vm3046 = vcmask 523264
        %v3048 = vsel %vm3046, %v3002, 0
        %v3051 = vsel %vm3046, %v3003, 0
        %v3054 = vsel %vm3046, %v3004, 0
        %v3057 = vsel %vm3046, %v3005, 0
        %v3060 = vsel %vm3046, %v3006, 0
        %v3063 = vsel %vm3046, %v3007, 0
        %v3066 = vsel %vm3046, %v3008, 0
        %v3069 = vsel %vm3046, %v3009, 0
        %3071 = vmatpush.bf16.msra.mxu0 0
        %3072 = vmatpush.bf16.msra.mxu0 0
        %3073 = vmatpush.bf16.msra.mxu0 0
        %3074 = vmatpush.bf16.msra.mxu0 0
        %3075 = vmatpush.bf16.msra.mxu0 %v3041
        %3076 = vmatpush.bf16.msra.mxu0 %v3040
        %3077 = vmatpush.bf16.msra.mxu0 %v3039
        %3078 = vmatpush.bf16.msra.mxu0 %v3038
        %3079 = vmatmul.bf16.gmra.mxu0 %v3048
        %v3080 = vpop.f32.mrf.mxu0
        %v3081 = vadd.f32 %v3020, %v3080
        %v3082 = vpop.f32.mrf.mxu0
        %v3083 = vadd.f32 %v3020, %v3082
        %3084 = vmatmul.bf16.gmra.mxu0 %v3051
        %v3085 = vpop.f32.mrf.mxu0
        %v3086 = vadd.f32 %v3020, %v3085
        %v3087 = vpop.f32.mrf.mxu0
        %v3088 = vadd.f32 %v3020, %v3087
        %3089 = vmatmul.bf16.gmra.mxu0 %v3054
        %v3090 = vpop.f32.mrf.mxu0
        %v3091 = vadd.f32 %v3020, %v3090
        %v3092 = vpop.f32.mrf.mxu0
        %v3093 = vadd.f32 %v3020, %v3092
        %3094 = vmatmul.bf16.gmra.mxu0 %v3057
        %v3095 = vpop.f32.mrf.mxu0
        %v3096 = vadd.f32 %v3020, %v3095
        %v3097 = vpop.f32.mrf.mxu0
        %v3098 = vadd.f32 %v3020, %v3097
        %3099 = vmatmul.bf16.gmra.mxu0 %v3060
        %v3100 = vpop.f32.mrf.mxu0
        %v3101 = vadd.f32 %v3020, %v3100
        %v3102 = vpop.f32.mrf.mxu0
        %v3103 = vadd.f32 %v3020, %v3102
        %3104 = vmatmul.bf16.gmra.mxu0 %v3063
        %v3105 = vpop.f32.mrf.mxu0
        %v3106 = vadd.f32 %v3020, %v3105
        %v3107 = vpop.f32.mrf.mxu0
        %v3108 = vadd.f32 %v3020, %v3107
        %3109 = vmatmul.bf16.gmra.mxu0 %v3066
        %v3110 = vpop.f32.mrf.mxu0
        %v3111 = vadd.f32 %v3020, %v3110
        %v3112 = vpop.f32.mrf.mxu0
        %v3113 = vadd.f32 %v3020, %v3112
        %3114 = vmatmul.bf16.gmra.mxu0 %v3069
        %v3115 = vpop.f32.mrf.mxu0
        %v3116 = vadd.f32 %v3020, %v3115
        %v3117 = vpop.f32.mrf.mxu0
        %v3118 = vadd.f32 %v3020, %v3117
        %3119 = vdwg.mxu0
        %v3120 = vadd.f32 %v2869, %v3081
        %v3121 = vadd.f32 %v2870, %v3083
        %v3122 = vadd.f32 %v2871, %v3086
        %v3123 = vadd.f32 %v2872, %v3088
        %v3124 = vadd.f32 %v2873, %v3091
        %v3125 = vadd.f32 %v2874, %v3093
        %v3126 = vadd.f32 %v2875, %v3096
        %v3127 = vadd.f32 %v2876, %v3098
        %v3128 = vadd.f32 %v2877, %v3101
        %v3129 = vadd.f32 %v2878, %v3103
        %v3130 = vadd.f32 %v2879, %v3106
        %v3131 = vadd.f32 %v2880, %v3108
        %v3132 = vadd.f32 %v2881, %v3111
        %v3133 = vadd.f32 %v2882, %v3113
        %v3134 = vadd.f32 %v2883, %v3116
        %v3135 = vadd.f32 %v2884, %v3118
        %3136 = vst.msk [vmem:[%s407] sm:$0xff] %vm2795, %v3120
        %3137 = vst.msk [vmem:[%s407 + $0x8] sm:$0xff] %vm2795, %v3121
        %3138 = vst.msk [vmem:[%s407 + $0x10] sm:$0xff] %vm2795, %v3122
        %3139 = vst.msk [vmem:[%s407 + $0x18] sm:$0xff] %vm2795, %v3123
        %3140 = vst.msk [vmem:[%s407 + $0x20] sm:$0xff] %vm2795, %v3124
        %3141 = vst.msk [vmem:[%s407 + $0x28] sm:$0xff] %vm2795, %v3125
        %3142 = vst.msk [vmem:[%s407 + $0x30] sm:$0xff] %vm2795, %v3126
        %3143 = vst.msk [vmem:[%s407 + $0x38] sm:$0xff] %vm2795, %v3127
        %3144 = vst.msk [vmem:[%s407 + $0x40] sm:$0xff] %vm2795, %v3128
        %3145 = vst.msk [vmem:[%s407 + $0x48] sm:$0xff] %vm2795, %v3129
        %3146 = vst.msk [vmem:[%s407 + $0x50] sm:$0xff] %vm2795, %v3130
        %3147 = vst.msk [vmem:[%s407 + $0x58] sm:$0xff] %vm2795, %v3131
        %3148 = vst.msk [vmem:[%s407 + $0x60] sm:$0xff] %vm2795, %v3132
        %3149 = vst.msk [vmem:[%s407 + $0x68] sm:$0xff] %vm2795, %v3133
        %3150 = vst.msk [vmem:[%s407 + $0x70] sm:$0xff] %vm2795, %v3134
        %3151 = vst.msk [vmem:[%s407 + $0x78] sm:$0xff] %vm2795, %v3135
        %s3152 = sand.u32 %s291, 1
        %s3153 = scalar_lea.sflag [#allocation3], %s3152
        %s3154 = sand.u32 %s291, 1
        %s3155 = smul.addr %s3154, 128
        %s3156 = scalar_lea.vmem [#allocation2], %s3155
        // Predicated region
        $region69: #{tsp_encoder.1} parent=67 // pred_check
          %p3157 = pneg %p301
        $region70: #{tsp_encoder.1} parent=67 // pred_check_branch
          %3159 = sbr.rel (%p3157) target = $region72
        $region71: #{tsp_encoder.1} parent=67 // pred_region
          %s3160 = smul.u32 16, %s26
          %3162 = vsyncadd %s3153, 0
          %s3163 = smul.addr %s3160, 8
          %s3164 = scalar_lea.hbm %s12, %s3163
          %s3165 = sshll.u32 %s3156, 4
          %s3166 = int_to_ptr.vmem [resolvable:$true] %s3165
          %s3167 = sshll.u32 %s3164, 4
          %s3168 = int_to_ptr.hbm [resolvable:$true] %s3167
          %3173 = dma.vmem_to_hbm [thread:$0]  %s3166, 2048, %s3168, %s3153, 128, 128, 8
        $region72: #{tsp_encoder.1} parent=67 // pred_fallthru
          _
      $region68: #{tsp_encoder.1} parent=5 // pred_fallthru
        _
      %p3174 = scmp.le.s32.totalorder 2, %s21
      // Predicated region
      $region73: #{tsp_encoder.1} parent=5 // pred_check
        %p3175 = pneg %p3174
      $region74: #{tsp_encoder.1} parent=5 // pred_check_branch
        %3177 = sbr.rel (%p3175) target = $region76
      $region75: #{tsp_encoder.1} parent=5 // pred_region
        %s3178 = ssub.s32 %s21, 2
        // Predicated region
        $region77: #{tsp_encoder.1} parent=75 // pred_check
          %p3179 = pneg %p307
        $region78: #{tsp_encoder.1} parent=75 // pred_check_branch
          %3181 = sbr.rel (%p3179) target = $region80
        $region79: #{tsp_encoder.1} parent=75 // pred_region
          %s3182 = sand.u32 %s292, 1
          %s3183 = scalar_lea.sflag [#allocation3], %s3182
          %s3184 = sand.u32 %s292, 1
          %s3185 = smul.addr %s3184, 128
          %s3186 = scalar_lea.vmem [#allocation2], %s3185
          %3188 = dma.done %s3183, 2048
        $region80: #{tsp_encoder.1} parent=75 // pred_fallthru
          _
      $region76: #{tsp_encoder.1} parent=5 // pred_fallthru
        _
    $region6: #{tsp_encoder.1} parent=1 // loop_footer
      %s25 = sadd.s32 1, %s21
    $region7: #{tsp_encoder.1} parent=1 // loop_footer_branch
      %20 = sbr.rel target = $region3
    $region8: #{tsp_encoder.1} parent=1 // loop_exit
      _
    %3189 = vsyncpa [#allocation3], 1
    %s3190 = scalar_lea.sflag [#allocation3], 1
    %3191 = vsyncpa %s3190, 1

</llo_original>
